<compile_context>
chip_gen: v7x
topology: tpu7x:2x2x1
jax: 0.10.0
libtpu: 0.0.40
codegen_flags: <defaults>
</compile_context>

<pallas_src>
import functools

import jax
import jax.numpy as jnp
from jax.experimental import pallas as pl
from jax.experimental.pallas import tpu as pltpu

EPS = 1e-5
LANE = 128
NUM_CORES = 2          # v7x has 2 TensorCores; extra grid steps are harmless on v5e/v6e


def _round_up(x, m):
    return (x + m - 1) // m * m


def _cdiv(a, b):
    return (a + b - 1) // b


# ----------------------------- Pallas kernels ------------------------------

def matmul_bn_act_kernel(a_ref, b_ref, shift_ref, o_ref, *, relu):
    # a: [TM, Kp] bf16, b: [Kp, TN] bf16 (BN scale pre-folded), shift: [1, TN] f32
    acc = jnp.dot(a_ref[...], b_ref[...], preferred_element_type=jnp.float32)
    y = acc + shift_ref[...]
    if relu:
        y = jnp.maximum(y, 0.0)
    o_ref[...] = y.astype(o_ref.dtype)


def matmul_bn_add_relu_kernel(a_ref, b_ref, shift_ref, id_ref, o_ref):
    # conv2 + BN2 + residual add + ReLU (identity tile streamed in bf16)
    acc = jnp.dot(a_ref[...], b_ref[...], preferred_element_type=jnp.float32)
    y = acc + shift_ref[...] + id_ref[...].astype(jnp.float32)
    o_ref[...] = jnp.maximum(y, 0.0).astype(o_ref.dtype)


def matmul_bn_ds_add_relu_kernel(a_ref, b_ref, shift_ref,
                                 xs_ref, wd_ref, dshift_ref, o_ref):
    # conv2 + BN2 + downsample(1x1 conv + BN) + residual add + ReLU, all fused
    acc = jnp.dot(a_ref[...], b_ref[...], preferred_element_type=jnp.float32)
    y = acc + shift_ref[...]
    idn = jnp.dot(xs_ref[...], wd_ref[...], preferred_element_type=jnp.float32)
    idn = idn + dshift_ref[...]
    o_ref[...] = jnp.maximum(y + idn, 0.0).astype(o_ref.dtype)


# ------------------------------ glue helpers --------------------------------

def _bn_fold(bn):
    """Fold BN(eval) into a per-channel scale (to be folded into W) and a shift."""
    gamma, beta, mean, var = bn
    scale = gamma / jnp.sqrt(var + EPS)          # [C] f32
    shift = beta - mean * scale                  # [C] f32
    return scale, shift


def _pad_shift(shift, cp):
    c = shift.shape[0]
    return jnp.pad(shift, (0, cp - c)).reshape(1, cp).astype(jnp.float32)


def _fold_weight(w2d, scale, kp, cp):
    """w2d: [K, Cout] f32; fold BN scale into columns, pad to [Kp, Cp], cast bf16."""
    wf = w2d * scale[None, :]
    k, c = wf.shape
    wf = jnp.pad(wf, ((0, kp - k), (0, cp - c)))
    return wf.astype(jnp.bfloat16)


def _im2col(x, kh, kw, stride, padding):
    # x: [N,H,W,C] (bf16); kh/kw/stride/padding are Python ints (static).
    N, H, W, C = x.shape
    xp = jnp.pad(x, ((0, 0), (padding, padding), (padding, padding), (0, 0)))
    OH = (H + 2 * padding - kh) // stride + 1
    OW = (W + 2 * padding - kw) // stride + 1
    cols = []
    for i in range(kh):
        for j in range(kw):
            cols.append(xp[:, i:i + stride * OH:stride, j:j + stride * OW:stride, :])
    patches = jnp.stack(cols, axis=3)              # [N,OH,OW,kh*kw,C] bf16
    return patches.reshape(N * OH * OW, kh * kw * C), OH, OW


def _pad2d(a, rows, cols):
    r, c = a.shape
    return jnp.pad(a, ((0, rows - r), (0, cols - c)))     # preserves dtype (bf16)


def _tile_m(m):
    # Grid-aware M tile: >= ~4 grid steps per TensorCore so the pipeline can
    # double-buffer the streamed A / Id tiles (important on v7x megacore).
    if m <= 128:
        return max(8, _round_up(m, 8))
    tm = _round_up(_cdiv(m, 4 * NUM_CORES), 128)
    return min(256, tm)


def _tile_n(cp):
    # 256-wide Cout tiles when possible (matches v6e/v7x 256-wide MXU), else 128.
    if cp % 256 == 0:
        return 256
    return min(cp, 128)


_COMPILER_PARAMS = pltpu.CompilerParams(
    dimension_semantics=("parallel", "parallel"))


# ------------------------------ op wrappers ---------------------------------

def conv_bn_act(x, w, bn, *, stride, padding, relu, out_dtype=jnp.bfloat16):
    """x: [N,H,W,Cin] bf16 , w: [KH,KW,Cin,Cout] f32, bn: (gamma,beta,mean,var)."""
    KH, KW, Cin, Cout = w.shape
    N = x.shape[0]
    A, OH, OW = _im2col(x, KH, KW, stride, padding)      # bf16
    M, K = A.shape
    TM = _tile_m(M)
    Mp, Kp, Cp = _round_up(M, TM), _round_up(K, LANE), _round_up(Cout, LANE)
    TN = _tile_n(Cp)

    A = _pad2d(A, Mp, Kp)                                 # bf16
    scale, shift = _bn_fold(bn)
    B = _fold_weight(w.reshape(K, Cout), scale, Kp, Cp)   # bf16, scale folded
    shift = _pad_shift(shift, Cp)

    out = pl.pallas_call(
        functools.partial(matmul_bn_act_kernel, relu=relu),
        out_shape=jax.ShapeDtypeStruct((Mp, Cp), out_dtype),
        grid=(Mp // TM, Cp // TN),
        in_specs=[pl.BlockSpec((TM, Kp), lambda i, j: (i, 0)),
                  pl.BlockSpec((Kp, TN), lambda i, j: (0, j)),
                  pl.BlockSpec((1, TN), lambda i, j: (0, j))],
        out_specs=pl.BlockSpec((TM, TN), lambda i, j: (i, j)),
        compiler_params=_COMPILER_PARAMS,
    )(A, B, shift)
    return out[:M, :Cout].reshape(N, OH, OW, Cout)


def conv_bn_add_relu(h, w, bn, identity):
    """conv2(h)+BN2 + identity + ReLU, fused.  h, identity: [N,OH,OW,*] bf16."""
    KH, KW, Cin, Cout = w.shape
    N, OH, OW, _ = h.shape
    A, _, _ = _im2col(h, KH, KW, 1, 1)
    M, K = A.shape
    TM = _tile_m(M)
    Mp, Kp, Cp = _round_up(M, TM), _round_up(K, LANE), _round_up(Cout, LANE)
    TN = _tile_n(Cp)

    A = _pad2d(A, Mp, Kp)
    scale, shift = _bn_fold(bn)
    B = _fold_weight(w.reshape(K, Cout), scale, Kp, Cp)
    shift = _pad_shift(shift, Cp)
    Id = _pad2d(identity.reshape(M, Cout).astype(jnp.bfloat16), Mp, Cp)

    out = pl.pallas_call(
        matmul_bn_add_relu_kernel,
        out_shape=jax.ShapeDtypeStruct((Mp, Cp), jnp.float32),
        grid=(Mp // TM, Cp // TN),
        in_specs=[pl.BlockSpec((TM, Kp), lambda i, j: (i, 0)),
                  pl.BlockSpec((Kp, TN), lambda i, j: (0, j)),
                  pl.BlockSpec((1, TN), lambda i, j: (0, j)),
                  pl.BlockSpec((TM, TN), lambda i, j: (i, j))],
        out_specs=pl.BlockSpec((TM, TN), lambda i, j: (i, j)),
        compiler_params=_COMPILER_PARAMS,
    )(A, B, shift, Id)
    return out[:M, :Cout].reshape(N, OH, OW, Cout)


def conv_bn_ds_add_relu(h, w, bn, x_in, wd, bnd, *, stride):
    """conv2(h)+BN2 + downsample(x_in; 1x1 conv stride + BN) + add + ReLU."""
    KH, KW, Cin, Cout = w.shape
    N, OH, OW, _ = h.shape
    A, _, _ = _im2col(h, KH, KW, 1, 1)
    M, K = A.shape

    # strided gather for the 1x1/stride downsample conv (same output grid)
    Xs = x_in[:, ::stride, ::stride, :]
    assert Xs.shape[1] == OH and Xs.shape[2] == OW
    Cin_ds = Xs.shape[-1]
    Xs = Xs.reshape(M, Cin_ds)

    TM = _tile_m(M)
    Mp = _round_up(M, TM)
    Kp = _round_up(K, LANE)
    Cp = _round_up(Cout, LANE)
    Kdp = _round_up(Cin_ds, LANE)
    TN = _tile_n(Cp)

    A = _pad2d(A, Mp, Kp)
    scale, shift = _bn_fold(bn)
    B = _fold_weight(w.reshape(K, Cout), scale, Kp, Cp)
    shift = _pad_shift(shift, Cp)

    Xs = _pad2d(Xs.astype(jnp.bfloat16), Mp, Kdp)
    dscale, dshift = _bn_fold(bnd)
    Wd = _fold_weight(wd.reshape(Cin_ds, Cout), dscale, Kdp, Cp)
    dshift = _pad_shift(dshift, Cp)

    out = pl.pallas_call(
        matmul_bn_ds_add_relu_kernel,
        out_shape=jax.ShapeDtypeStruct((Mp, Cp), jnp.float32),
        grid=(Mp // TM, Cp // TN),
        in_specs=[pl.BlockSpec((TM, Kp), lambda i, j: (i, 0)),
                  pl.BlockSpec((Kp, TN), lambda i, j: (0, j)),
                  pl.BlockSpec((1, TN), lambda i, j: (0, j)),
                  pl.BlockSpec((TM, Kdp), lambda i, j: (i, 0)),
                  pl.BlockSpec((Kdp, TN), lambda i, j: (0, j)),
                  pl.BlockSpec((1, TN), lambda i, j: (0, j))],
        out_specs=pl.BlockSpec((TM, TN), lambda i, j: (i, j)),
        compiler_params=_COMPILER_PARAMS,
    )(A, B, shift, Xs, Wd, dshift)
    return out[:M, :Cout].reshape(N, OH, OW, Cout)


# ------------------------------- forward -------------------------------------

def basic_block_forward(params, x_nchw, *, stride):
    """BasicBlock.forward (eval-mode BN).  x_nchw: [N,Cin,H,W] -> [N,Cout,OH,OW]."""
    x = jnp.transpose(x_nchw, (0, 2, 3, 1)).astype(jnp.bfloat16)     # NHWC bf16
    # conv1 -> bn1 -> relu   (bf16 intermediate activation for the next MXU pass)
    h = conv_bn_act(x, params['conv1_w'], params['bn1'],
                    stride=stride, padding=1, relu=True, out_dtype=jnp.bfloat16)
    # conv2 -> bn2 -> (+ residual) -> relu  (single fused pallas_call)
    if 'down_w' in params:
        out = conv_bn_ds_add_relu(h, params['conv2_w'], params['bn2'],
                                  x, params['down_w'], params['down_bn'],
                                  stride=stride)
    else:
        out = conv_bn_add_relu(h, params['conv2_w'], params['bn2'], x)
    return jnp.transpose(out, (0, 3, 1, 2))                          # NCHW f32


# ---------------------------- pure-JAX reference ------------------------------

def _bn_ref(x, bn):
    gamma, beta, mean, var = bn
    return (x - mean) / jnp.sqrt(var + EPS) * gamma + beta


def _conv_ref(x, w, stride, padding):
    return jax.lax.conv_general_dilated(
        x, w, window_strides=(stride, stride),
        padding=((padding, padding), (padding, padding)),
        dimension_numbers=('NHWC', 'HWIO', 'NHWC'))


def basic_block_ref(params, x_nchw, *, stride):
    x = jnp.transpose(x_nchw, (0, 2, 3, 1))
    h = jnp.maximum(_bn_ref(_conv_ref(x, params['conv1_w'], stride, 1),
                            params['bn1']), 0.0)
    out = _bn_ref(_conv_ref(h, params['conv2_w'], 1, 1), params['bn2'])
    if 'down_w' in params:
        identity = _bn_ref(_conv_ref(x, params['down_w'], stride, 0),
                           params['down_bn'])
    else:
        identity = x
    return jnp.transpose(jnp.maximum(out + identity, 0.0), (0, 3, 1, 2))


# ------------------------------ parameters ------------------------------------

def make_block_params(key, inplanes, planes, stride):
    ks = jax.random.split(key, 6)

    def kaiming(k, kh, kw, cin, cout):
        fan_out = cout * kh * kw
        return jax.random.normal(k, (kh, kw, cin, cout), jnp.float32) * (2.0 / fan_out) ** 0.5

    def bn(k, c):
        kg, kb, km, kv = jax.random.split(k, 4)
        gamma = 1.0 + 0.1 * jax.random.normal(kg, (c,), jnp.float32)
        beta = 0.1 * jax.random.normal(kb, (c,), jnp.float32)
        mean = 0.1 * jax.random.normal(km, (c,), jnp.float32)
        var = jnp.abs(1.0 + 0.1 * jax.random.normal(kv, (c,), jnp.float32))
        return (gamma, beta, mean, var)

    p = {
        'conv1_w': kaiming(ks[0], 3, 3, inplanes, planes),
        'bn1': bn(ks[1], planes),
        'conv2_w': kaiming(ks[2], 3, 3, planes, planes),
        'bn2': bn(ks[3], planes),
    }
    if stride != 1 or inplanes != planes:        # BasicBlock.expansion == 1
        p['down_w'] = kaiming(ks[4], 1, 1, inplanes, planes)
        p['down_bn'] = bn(ks[5], planes)
    return p


# --------------------------------- main ---------------------------------------

if __name__ == "__main__":
    key = jax.random.PRNGKey(0)
    kx1, kx2, kp1, kp2 = jax.random.split(key, 4)

    # Case 1: BasicBlock with downsample (stride=2, channel change)
    x1 = jax.random.normal(kx1, (2, 32, 32, 32), jnp.float32)        # NCHW
    p1 = make_block_params(kp1, inplanes=32, planes=64, stride=2)
    fwd1 = jax.jit(functools.partial(basic_block_forward, stride=2))
    y1 = jax.block_until_ready(fwd1(p1, x1))
    assert y1.shape == (2, 64, 16, 16), y1.shape
    assert bool(jnp.all(jnp.isfinite(y1)))
    r1 = basic_block_ref(p1, x1, stride=2)
    assert float(jnp.max(jnp.abs(y1 - r1))) < 0.2

    # Case 2: identity BasicBlock (stride=1, same channels, no downsample)
    x2 = jax.random.normal(kx2, (2, 64, 16, 16), jnp.float32)        # NCHW
    p2 = make_block_params(kp2, inplanes=64, planes=64, stride=1)
    fwd2 = jax.jit(functools.partial(basic_block_forward, stride=1))
    y2 = jax.block_until_ready(fwd2(p2, x2))
    assert y2.shape == (2, 64, 16, 16), y2.shape
    assert bool(jnp.all(jnp.isfinite(y2)))
    r2 = basic_block_ref(p2, x2, stride=1)
    assert float(jnp.max(jnp.abs(y2 - r2))) < 0.2

    print("KERNEL_OK")
</pallas_src>

<mosaic_0001>
module attributes {stable_mosaic.version = 11 : i64} {
  func.func @matmul_bn_act_kernel(%arg0: i32, %arg1: i32, %arg2: memref<128x384xbf16, #tpu.memory_space<vmem>>, %arg3: memref<384x128xbf16, #tpu.memory_space<vmem>>, %arg4: memref<1x128xf32, #tpu.memory_space<vmem>>, %arg5: memref<128x128xbf16, #tpu.memory_space<vmem>>) attributes {dimension_semantics = [#tpu.dimension_semantics<parallel>, #tpu.dimension_semantics<parallel>], iteration_bounds = array<i64: 4, 1>, scalar_prefetch = 0 : i64, scratch_operands = 0 : i64, tpu.core_type = #tpu.core_type<tc>, window_params = [{transform_indices = @transform_0, window_bounds = array<i64: 128, 384>}, {transform_indices = @transform_1, window_bounds = array<i64: 384, 128>}, {transform_indices = @transform_2, window_bounds = array<i64: 1, 128>}, {transform_indices = @transform_3, window_bounds = array<i64: 128, 128>}]} {
    %c0 = arith.constant 0 : index
    %c0_0 = arith.constant 0 : index
    %0 = vector.load %arg2[%c0, %c0_0] : memref<128x384xbf16, #tpu.memory_space<vmem>>, vector<128x384xbf16>
    %c0_1 = arith.constant 0 : index
    %c0_2 = arith.constant 0 : index
    %1 = vector.load %arg3[%c0_1, %c0_2] : memref<384x128xbf16, #tpu.memory_space<vmem>>, vector<384x128xbf16>
    %cst = arith.constant dense<0.000000e+00> : vector<128x128xf32>
    %2 = tpu.matmul %0, %1, %cst {dimension_numbers = #tpu.dot_dimension_numbers<[1], [0], [0], [1], [0, 0, 1, 1], [], []>} : vector<128x384xbf16>, vector<384x128xbf16>, vector<128x128xf32> -> vector<128x128xf32>
    %c0_3 = arith.constant 0 : index
    %c0_4 = arith.constant 0 : index
    %3 = vector.load %arg4[%c0_3, %c0_4] : memref<1x128xf32, #tpu.memory_space<vmem>>, vector<1x128xf32>
    %4 = vector.broadcast %3 : vector<1x128xf32> to vector<128x128xf32>
    %5 = arith.addf %2, %4 : vector<128x128xf32>
    %cst_5 = arith.constant 0.000000e+00 : f32
    %6 = vector.broadcast %cst_5 : f32 to vector<128x128xf32>
    %7 = arith.maximumf %5, %6 : vector<128x128xf32>
    %8 = arith.truncf %7 : vector<128x128xf32> to vector<128x128xbf16>
    %c0_6 = arith.constant 0 : index
    %c0_7 = arith.constant 0 : index
    %9 = vector.load %arg5[%c0_6, %c0_7] : memref<128x128xbf16, #tpu.memory_space<vmem>>, vector<128x128xbf16>
    tpu.vector_store %arg5[%c0_6, %c0_7], %8 {strides = array<i32>} : memref<128x128xbf16, #tpu.memory_space<vmem>>, vector<128x128xbf16>,
    return
  }
  func.func @transform_0(%arg0: i32, %arg1: i32) -> (i32, i32) {
    %c0_i32 = arith.constant 0 : i32
    %c0_i32_0 = arith.constant 0 : i32
    return %arg0, %c0_i32 : i32, i32
  }
  func.func @transform_1(%arg0: i32, %arg1: i32) -> (i32, i32) {
    %c0_i32 = arith.constant 0 : i32
    %c0_i32_0 = arith.constant 0 : i32
    return %c0_i32, %arg1 : i32, i32
  }
  func.func @transform_2(%arg0: i32, %arg1: i32) -> (i32, i32) {
    %c0_i32 = arith.constant 0 : i32
    %c0_i32_0 = arith.constant 0 : i32
    return %c0_i32, %arg1 : i32, i32
  }
  func.func @transform_3(%arg0: i32, %arg1: i32) -> (i32, i32) {
    %c0_i32 = arith.constant 0 : i32
    return %arg0, %arg1 : i32, i32
  }
}

module attributes {stable_mosaic.version = 11 : i64} {
  func.func @matmul_bn_ds_add_relu_kernel(%arg0: i32, %arg1: i32, %arg2: memref<128x640xbf16, #tpu.memory_space<vmem>>, %arg3: memref<640x128xbf16, #tpu.memory_space<vmem>>, %arg4: memref<1x128xf32, #tpu.memory_space<vmem>>, %arg5: memref<128x128xbf16, #tpu.memory_space<vmem>>, %arg6: memref<128x128xbf16, #tpu.memory_space<vmem>>, %arg7: memref<1x128xf32, #tpu.memory_space<vmem>>, %arg8: memref<128x128xf32, #tpu.memory_space<vmem>>) attributes {dimension_semantics = [#tpu.dimension_semantics<parallel>, #tpu.dimension_semantics<parallel>], iteration_bounds = array<i64: 4, 1>, scalar_prefetch = 0 : i64, scratch_operands = 0 : i64, tpu.core_type = #tpu.core_type<tc>, window_params = [{transform_indices = @transform_0, window_bounds = array<i64: 128, 640>}, {transform_indices = @transform_1, window_bounds = array<i64: 640, 128>}, {transform_indices = @transform_2, window_bounds = array<i64: 1, 128>}, {transform_indices = @transform_3, window_bounds = array<i64: 128, 128>}, {transform_indices = @transform_4, window_bounds = array<i64: 128, 128>}, {transform_indices = @transform_5, window_bounds = array<i64: 1, 128>}, {transform_indices = @transform_6, window_bounds = array<i64: 128, 128>}]} {
    %c0 = arith.constant 0 : index
    %c0_0 = arith.constant 0 : index
    %0 = vector.load %arg2[%c0, %c0_0] : memref<128x640xbf16, #tpu.memory_space<vmem>>, vector<128x640xbf16>
    %c0_1 = arith.constant 0 : index
    %c0_2 = arith.constant 0 : index
    %1 = vector.load %arg3[%c0_1, %c0_2] : memref<640x128xbf16, #tpu.memory_space<vmem>>, vector<640x128xbf16>
    %cst = arith.constant dense<0.000000e+00> : vector<128x128xf32>
    %2 = tpu.matmul %0, %1, %cst {dimension_numbers = #tpu.dot_dimension_numbers<[1], [0], [0], [1], [0, 0, 1, 1], [], []>} : vector<128x640xbf16>, vector<640x128xbf16>, vector<128x128xf32> -> vector<128x128xf32>
    %c0_3 = arith.constant 0 : index
    %c0_4 = arith.constant 0 : index
    %3 = vector.load %arg4[%c0_3, %c0_4] : memref<1x128xf32, #tpu.memory_space<vmem>>, vector<1x128xf32>
    %4 = vector.broadcast %3 : vector<1x128xf32> to vector<128x128xf32>
    %5 = arith.addf %2, %4 : vector<128x128xf32>
    %c0_5 = arith.constant 0 : index
    %c0_6 = arith.constant 0 : index
    %6 = vector.load %arg5[%c0_5, %c0_6] : memref<128x128xbf16, #tpu.memory_space<vmem>>, vector<128x128xbf16>
    %c0_7 = arith.constant 0 : index
    %c0_8 = arith.constant 0 : index
    %7 = vector.load %arg6[%c0_7, %c0_8] : memref<128x128xbf16, #tpu.memory_space<vmem>>, vector<128x128xbf16>
    %cst_9 = arith.constant dense<0.000000e+00> : vector<128x128xf32>
    %8 = tpu.matmul %6, %7, %cst_9 {dimension_numbers = #tpu.dot_dimension_numbers<[1], [0], [0], [1], [0, 0, 1, 1], [], []>} : vector<128x128xbf16>, vector<128x128xbf16>, vector<128x128xf32> -> vector<128x128xf32>
    %c0_10 = arith.constant 0 : index
    %c0_11 = arith.constant 0 : index
    %9 = vector.load %arg7[%c0_10, %c0_11] : memref<1x128xf32, #tpu.memory_space<vmem>>, vector<1x128xf32>
    %10 = vector.broadcast %9 : vector<1x128xf32> to vector<128x128xf32>
    %11 = arith.addf %8, %10 : vector<128x128xf32>
    %12 = arith.addf %5, %11 : vector<128x128xf32>
    %cst_12 = arith.constant 0.000000e+00 : f32
    %13 = vector.broadcast %cst_12 : f32 to vector<128x128xf32>
    %14 = arith.maximumf %12, %13 : vector<128x128xf32>
    %c0_13 = arith.constant 0 : index
    %c0_14 = arith.constant 0 : index
    %15 = vector.load %arg8[%c0_13, %c0_14] : memref<128x128xf32, #tpu.memory_space<vmem>>, vector<128x128xf32>
    tpu.vector_store %arg8[%c0_13, %c0_14], %14 {strides = array<i32>} : memref<128x128xf32, #tpu.memory_space<vmem>>, vector<128x128xf32>,
    return
  }
  func.func @transform_0(%arg0: i32, %arg1: i32) -> (i32, i32) {
    %c0_i32 = arith.constant 0 : i32
    %c0_i32_0 = arith.constant 0 : i32
    return %arg0, %c0_i32 : i32, i32
  }
  func.func @transform_1(%arg0: i32, %arg1: i32) -> (i32, i32) {
    %c0_i32 = arith.constant 0 : i32
    %c0_i32_0 = arith.constant 0 : i32
    return %c0_i32, %arg1 : i32, i32
  }
  func.func @transform_2(%arg0: i32, %arg1: i32) -> (i32, i32) {
    %c0_i32 = arith.constant 0 : i32
    %c0_i32_0 = arith.constant 0 : i32
    return %c0_i32, %arg1 : i32, i32
  }
  func.func @transform_3(%arg0: i32, %arg1: i32) -> (i32, i32) {
    %c0_i32 = arith.constant 0 : i32
    %c0_i32_0 = arith.constant 0 : i32
    return %arg0, %c0_i32 : i32, i32
  }
  func.func @transform_4(%arg0: i32, %arg1: i32) -> (i32, i32) {
    %c0_i32 = arith.constant 0 : i32
    %c0_i32_0 = arith.constant 0 : i32
    return %c0_i32, %arg1 : i32, i32
  }
  func.func @transform_5(%arg0: i32, %arg1: i32) -> (i32, i32) {
    %c0_i32 = arith.constant 0 : i32
    %c0_i32_0 = arith.constant 0 : i32
    return %c0_i32, %arg1 : i32, i32
  }
  func.func @transform_6(%arg0: i32, %arg1: i32) -> (i32, i32) {
    %c0_i32 = arith.constant 0 : i32
    return %arg0, %arg1 : i32, i32
  }
}

</mosaic_0001>

<llo_original>
// kernel: basic_block_forward.2
$region0: #{basic_block_forward.2}
  #allocation0 [shape = 'u32[]', space=smem, size = 0x4, offset = 0x4, fixed_abs, tag = 'smem constant byte address 0x4 - core index']
  #allocation1 [shape = 'u32[144,128]{1,0:T(1,128)}', space=vmem, size = 0x12000, scoped, tag = 'internal scratch']
  %s0 = inlined_call_operand.vmem [shape: bf16[512,384], index: 0, kind: input, shape index: {}]
  %s1 = inlined_call_operand.vmem [shape: bf16[384,128], index: 1, kind: input, shape index: {}]
  %s2 = inlined_call_operand.vmem [shape: f32[1,128], index: 2, kind: input, shape index: {}]
  %s3 = inlined_call_operand.vmem [shape: bf16[512,128], index: 3, kind: output, shape index: {}]
  %s4 = sld [smem:[#allocation0]]
  $region45: #{basic_block_forward.2} parent=0
    _
  %s6 = ssub.s32 1, %s4
  %s7 = scalar_select 0, %s6, %s4
  loop: start=0, step=1, limit=6
  $region2: #{basic_block_forward.2} parent=0 // loop_pre_header
    _
  $region3: #{basic_block_forward.2} parent=0 // loop_header
    %s9 = sphi 0, %s13
    %p10 = scmp.ge.s32.totalorder %s9, 6
    %s16 = sphi 0, %s28
    %s17 = sphi 0, %s24
    %s18 = sphi 0, %s16
    %s19 = sphi 0, %s17
    %s20 = sphi 0, %s18
    %s21 = sphi 0, %s19
    %s31 = sphi 0, %s33
    %s34 = sphi 0, %s31
    %s35 = sphi 0, %s34
    %s51 = sphi 0, %s35
    %s57 = sphi 0, %s59
    %s60 = sphi 0, %s57
    %s61 = sphi 0, %s60
    %s77 = sphi 0, %s61
    %s83 = sphi 0, %s85
    %s86 = sphi 0, %s83
    %s87 = sphi 0, %s86
    %s103 = sphi 0, %s87
    %s111 = sphi 0, %s113
    %s114 = sphi 0, %s111
    %s115 = sphi 0, %s114
    %s131 = sphi 0, %s115
  $region4: #{basic_block_forward.2} parent=0 // loop_header_branch
    %12 = sbr.rel (%p10) target = $region8
  $region5: #{basic_block_forward.2} parent=0 // loop_body
    %s14 = ssub.s32 %s9, 1
    %s15 = ssub.s32 %s9, 2
    %s22 = sadd.s32 1, %s17
    %p23 = scmp.ge.s32.totalorder %s22, 1
    %s24 = scalar_select %p23, 0, %s22
    %s25 = sadd.s32 1, %s16
    %s26 = scalar_select %p23, %s25, %s16
    %p27 = scmp.ge.s32.totalorder %s26, 4
    %s28 = scalar_select %p27, 0, %s26
    %s29 = ssub.s32 %s16, %s28
    %p30 = scmp.eq.s32.totalorder %s29, 0
    %s32 = sadd.s32 %s31, 1
    %s33 = scalar_select %p30, %s31, %s32
    %p36 = pneg %p30
    %p37 = scmp.eq.s32.totalorder %s9, 3
    %p38 = por %p36, %p37
    %p39 = scmp.ne.s32.totalorder %s31, %s34
    %p40 = scmp.eq.s32.totalorder %s9, 0
    %p41 = por %p39, %p40
    %p42 = scmp.ne.s32.totalorder %s31, %s34
    %p43 = scmp.eq.s32.totalorder %s14, 3
    %p44 = por %p42, %p43
    %p45 = scmp.ne.s32.totalorder %s34, %s35
    %p46 = scmp.eq.s32.totalorder %s14, 0
    %p47 = por %p45, %p46
    %p48 = scmp.ne.s32.totalorder %s34, %s35
    %p49 = scmp.eq.s32.totalorder %s15, 3
    %p50 = por %p48, %p49
    %p52 = scmp.ne.s32.totalorder %s35, %s51
    %p53 = scmp.eq.s32.totalorder %s15, 0
    %p54 = por %p52, %p53
    %s55 = ssub.s32 %s17, %s24
    %p56 = scmp.eq.s32.totalorder %s55, 0
    %s58 = sadd.s32 %s57, 1
    %s59 = scalar_select %p56, %s57, %s58
    %p62 = pneg %p56
    %p63 = scmp.eq.s32.totalorder %s9, 3
    %p64 = por %p62, %p63
    %p65 = scmp.ne.s32.totalorder %s57, %s60
    %p66 = scmp.eq.s32.totalorder %s9, 0
    %p67 = por %p65, %p66
    %p68 = scmp.ne.s32.totalorder %s57, %s60
    %p69 = scmp.eq.s32.totalorder %s14, 3
    %p70 = por %p68, %p69
    %p71 = scmp.ne.s32.totalorder %s60, %s61
    %p72 = scmp.eq.s32.totalorder %s14, 0
    %p73 = por %p71, %p72
    %p74 = scmp.ne.s32.totalorder %s60, %s61
    %p75 = scmp.eq.s32.totalorder %s15, 3
    %p76 = por %p74, %p75
    %p78 = scmp.ne.s32.totalorder %s61, %s77
    %p79 = scmp.eq.s32.totalorder %s15, 0
    %p80 = por %p78, %p79
    %s81 = ssub.s32 %s17, %s24
    %p82 = scmp.eq.s32.totalorder %s81, 0
    %s84 = sadd.s32 %s83, 1
    %s85 = scalar_select %p82, %s83, %s84
    %p88 = pneg %p82
    %p89 = scmp.eq.s32.totalorder %s9, 3
    %p90 = por %p88, %p89
    %p91 = scmp.ne.s32.totalorder %s83, %s86
    %p92 = scmp.eq.s32.totalorder %s9, 0
    %p93 = por %p91, %p92
    %p94 = scmp.ne.s32.totalorder %s83, %s86
    %p95 = scmp.eq.s32.totalorder %s14, 3
    %p96 = por %p94, %p95
    %p97 = scmp.ne.s32.totalorder %s86, %s87
    %p98 = scmp.eq.s32.totalorder %s14, 0
    %p99 = por %p97, %p98
    %p100 = scmp.ne.s32.totalorder %s86, %s87
    %p101 = scmp.eq.s32.totalorder %s15, 3
    %p102 = por %p100, %p101
    %p104 = scmp.ne.s32.totalorder %s87, %s103
    %p105 = scmp.eq.s32.totalorder %s15, 0
    %p106 = por %p104, %p105
    %s107 = ssub.s32 %s16, %s28
    %s108 = ssub.s32 %s17, %s24
    %s109 = sor.u32 %s107, %s108
    %p110 = scmp.eq.s32.totalorder %s109, 0
    %s112 = sadd.s32 %s111, 1
    %s113 = scalar_select %p110, %s111, %s112
    %p116 = pneg %p110
    %p117 = scmp.eq.s32.totalorder %s9, 3
    %p118 = por %p116, %p117
    %p119 = scmp.ne.s32.totalorder %s111, %s114
    %p120 = scmp.eq.s32.totalorder %s9, 0
    %p121 = por %p119, %p120
    %p122 = scmp.ne.s32.totalorder %s111, %s114
    %p123 = scmp.eq.s32.totalorder %s14, 3
    %p124 = por %p122, %p123
    %p125 = scmp.ne.s32.totalorder %s114, %s115
    %p126 = scmp.eq.s32.totalorder %s14, 0
    %p127 = por %p125, %p126
    %p128 = scmp.ne.s32.totalorder %s114, %s115
    %p129 = scmp.eq.s32.totalorder %s15, 3
    %p130 = por %p128, %p129
    %p132 = scmp.ne.s32.totalorder %s115, %s131
    %p133 = scmp.eq.s32.totalorder %s15, 0
    %p134 = por %p132, %p133
    %p135 = scmp.le.s32.totalorder 1, %s9
    %p136 = scmp.lt.s32.totalorder %s9, 5
    %p137 = pnand %p135, %p136
    %p138 = pneg %p137
    // Predicated region
    $region9: #{basic_block_forward.2} parent=5 // pred_check
      _
    $region10: #{basic_block_forward.2} parent=5 // pred_check_branch
      %140 = sbr.rel (%p137) target = $region12
    $region11: #{basic_block_forward.2} parent=5 // pred_region
      %s141 = ssub.s32 %s9, 1
      // Predicated region
      $region13: #{basic_block_forward.2} parent=11 // pred_check
        %p142 = pneg %p73
      $region14: #{basic_block_forward.2} parent=11 // pred_check_branch
        %144 = sbr.rel (%p142) target = $region16
      $region15: #{basic_block_forward.2} parent=11 // pred_region
        %p145 = scmp.lt.s32.totalorder %s19, 0
        %s146 = scalar_select %p145, %s19, 0
        %s147 = smul.addr %s146, 4
        %s148 = scalar_lea.vmem %s1, %s147
      $region16: #{basic_block_forward.2} parent=11 // pred_fallthru
        _
      // Predicated region
      $region17: #{basic_block_forward.2} parent=11 // pred_check
        %p149 = pneg %p99
      $region18: #{basic_block_forward.2} parent=11 // pred_check_branch
        %151 = sbr.rel (%p149) target = $region20
      $region19: #{basic_block_forward.2} parent=11 // pred_region
        %p152 = scmp.lt.s32.totalorder %s19, 0
        %s153 = scalar_select %p152, %s19, 0
        %s154 = scalar_lea.vmem %s2, %s153
      $region20: #{basic_block_forward.2} parent=11 // pred_fallthru
        _
    $region12: #{basic_block_forward.2} parent=5 // pred_fallthru
      _
    %p155 = scmp.lt.s32.totalorder %s9, 4
    // Predicated region
    $region21: #{basic_block_forward.2} parent=5 // pred_check
      %p156 = pneg %p155
    $region22: #{basic_block_forward.2} parent=5 // pred_check_branch
      %158 = sbr.rel (%p156) target = $region24
    $region23: #{basic_block_forward.2} parent=5 // pred_region
      // Predicated region
      $region25: #{basic_block_forward.2} parent=23 // pred_check
        %p159 = pneg %p41
      $region26: #{basic_block_forward.2} parent=23 // pred_check_branch
        %161 = sbr.rel (%p159) target = $region28
      $region27: #{basic_block_forward.2} parent=23 // pred_region
        %s162 = smul.u32 16, %s16
        %p163 = scmp.lt.s32.totalorder %s162, 63
        %s164 = scalar_select %p163, %s162, 63
        %s165 = smul.addr %s164, 3
        %s166 = smul.addr %s165, 4
        %s167 = scalar_lea.vmem %s0, %s166
        %s168 = smul.u32 16, %s16
      $region28: #{basic_block_forward.2} parent=23 // pred_fallthru
        _
    $region24: #{basic_block_forward.2} parent=5 // pred_fallthru
      _
    %p169 = scmp.le.s32.totalorder 1, %s9
    %p170 = scmp.lt.s32.totalorder %s9, 5
    %p171 = pnand %p169, %p170
    %p172 = pneg %p171
    // Predicated region
    $region29: #{basic_block_forward.2} parent=5 // pred_check
      _
    $region30: #{basic_block_forward.2} parent=5 // pred_check_branch
      %174 = sbr.rel (%p171) target = $region32
    $region31: #{basic_block_forward.2} parent=5 // pred_region
      %s175 = ssub.s32 %s9, 1
      %s176 = smul.u32 16, %s18
      %p177 = scmp.lt.s32.totalorder %s176, 63
      %s178 = scalar_select %p177, %s176, 63
      %s179 = smul.addr %s178, 3
      %s180 = smul.addr %s179, 4
      %s181 = scalar_lea.vmem %s0, %s180
      %p182 = pneg %p47
      %p183 = pneg %p44
      %p184 = scmp.lt.s32.totalorder %s19, 0
      %s185 = scalar_select %p184, %s19, 0
      %s186 = smul.addr %s185, 4
      %s187 = scalar_lea.vmem %s1, %s186
      %p188 = pneg %p73
      %p189 = pneg %p70
      %p190 = scmp.lt.s32.totalorder %s19, 0
      %s191 = scalar_select %p190, %s19, 0
      %s192 = scalar_lea.vmem %s2, %s191
      %p193 = pneg %p99
      %p194 = pneg %p96
      %p195 = pneg %p127
      %p196 = pneg %p124
      %s197 = smul.u32 16, %s18
      %p198 = scmp.lt.s32.totalorder %s197, 63
      %s199 = scalar_select %p198, %s197, 63
      %p200 = scmp.lt.s32.totalorder %s19, 0
      %s201 = scalar_select %p200, %s19, 0
      %s202 = sadd.s32 %s201, %s199
      %s203 = smul.addr %s202, 4
      %s204 = scalar_lea.vmem %s3, %s203
      %s205 = smul.u32 16, %s18
      %p206 = scmp.lt.s32.totalorder %s205, 63
      %s207 = scalar_select %p206, %s205, 63
      %s208 = smul.addr %s207, 3
      %s209 = smul.addr %s208, 4
      %s210 = scalar_lea.vmem %s0, %s209
      %s211 = smul.u32 16, %s18
      %p212 = scmp.lt.s32.totalorder %s19, 0
      %s213 = scalar_select %p212, %s19, 0
      %s214 = smul.addr %s213, 4
      %s215 = scalar_lea.vmem %s1, %s214
      %p216 = scmp.lt.s32.totalorder %s19, 0
      %s217 = scalar_select %p216, %s19, 0
      %s218 = scalar_lea.vmem %s2, %s217
      %s219 = smul.u32 16, %s18
      %p220 = scmp.lt.s32.totalorder %s219, 63
      %s221 = scalar_select %p220, %s219, 63
      %p222 = scmp.lt.s32.totalorder %s19, 0
      %s223 = scalar_select %p222, %s19, 0
      %s224 = sadd.s32 %s223, %s221
      %s225 = smul.addr %s224, 4
      %s226 = scalar_lea.vmem %s3, %s225
      %s227 = smul.u32 16, %s18
      %v229 = vld [vmem:[%s210] sm:$0xff]
      %v230 = vld [vmem:[%s210 + $0x8] sm:$0xf]
      %v231 = vld [vmem:[%s210 + $0xc] sm:$0xff]
      %v232 = vld [vmem:[%s210 + $0x14] sm:$0xf]
      %v233 = vld [vmem:[%s210 + $0x18] sm:$0xff]
      %v234 = vld [vmem:[%s210 + $0x20] sm:$0xf]
      %v235 = vld [vmem:[%s210 + $0x24] sm:$0xff]
      %v236 = vld [vmem:[%s210 + $0x2c] sm:$0xf]
      %v237 = vld [vmem:[%s210 + $0x30] sm:$0xff]
      %v238 = vld [vmem:[%s210 + $0x38] sm:$0xf]
      %v239 = vld [vmem:[%s210 + $0x3c] sm:$0xff]
      %v240 = vld [vmem:[%s210 + $0x44] sm:$0xf]
      %v241 = vld [vmem:[%s210 + $0x48] sm:$0xff]
      %v242 = vld [vmem:[%s210 + $0x50] sm:$0xf]
      %v243 = vld [vmem:[%s210 + $0x54] sm:$0xff]
      %v244 = vld [vmem:[%s210 + $0x5c] sm:$0xf]
      %v245 = vld [vmem:[%s210 + $0x60] sm:$0xff]
      %v246 = vld [vmem:[%s210 + $0x68] sm:$0xf]
      %v247 = vld [vmem:[%s210 + $0x6c] sm:$0xff]
      %v248 = vld [vmem:[%s210 + $0x74] sm:$0xf]
      %v249 = vld [vmem:[%s210 + $0x78] sm:$0xff]
      %v250 = vld [vmem:[%s210 + $0x80] sm:$0xf]
      %v251 = vld [vmem:[%s210 + $0x84] sm:$0xff]
      %v252 = vld [vmem:[%s210 + $0x8c] sm:$0xf]
      %v253 = vld [vmem:[%s210 + $0x90] sm:$0xff]
      %v254 = vld [vmem:[%s210 + $0x98] sm:$0xf]
      %v255 = vld [vmem:[%s210 + $0x9c] sm:$0xff]
      %v256 = vld [vmem:[%s210 + $0xa4] sm:$0xf]
      %v257 = vld [vmem:[%s210 + $0xa8] sm:$0xff]
      %v258 = vld [vmem:[%s210 + $0xb0] sm:$0xf]
      %v259 = vld [vmem:[%s210 + $0xb4] sm:$0xff]
      %v260 = vld [vmem:[%s210 + $0xbc] sm:$0xf]
      %v261 = vld [vmem:[%s215] sm:$0xf]
      %v262 = vld [vmem:[%s215 + $0x4] sm:$0xf]
      %v263 = vld [vmem:[%s215 + $0x8] sm:$0xf]
      %v264 = vld [vmem:[%s215 + $0xc] sm:$0xf]
      %v265 = vld [vmem:[%s215 + $0x10] sm:$0xf]
      %v266 = vld [vmem:[%s215 + $0x14] sm:$0xf]
      %v267 = vld [vmem:[%s215 + $0x18] sm:$0xf]
      %v268 = vld [vmem:[%s215 + $0x1c] sm:$0xf]
      %v269 = vld [vmem:[%s215 + $0x20] sm:$0xf]
      %v270 = vld [vmem:[%s215 + $0x24] sm:$0xf]
      %v271 = vld [vmem:[%s215 + $0x28] sm:$0xf]
      %v272 = vld [vmem:[%s215 + $0x2c] sm:$0xf]
      %v273 = vld [vmem:[%s215 + $0x30] sm:$0xf]
      %v274 = vld [vmem:[%s215 + $0x34] sm:$0xf]
      %v275 = vld [vmem:[%s215 + $0x38] sm:$0xf]
      %v276 = vld [vmem:[%s215 + $0x3c] sm:$0xf]
      %v277 = vld [vmem:[%s215 + $0x40] sm:$0xf]
      %v278 = vld [vmem:[%s215 + $0x44] sm:$0xf]
      %v279 = vld [vmem:[%s215 + $0x48] sm:$0xf]
      %v280 = vld [vmem:[%s215 + $0x4c] sm:$0xf]
      %v281 = vld [vmem:[%s215 + $0x50] sm:$0xf]
      %v282 = vld [vmem:[%s215 + $0x54] sm:$0xf]
      %v283 = vld [vmem:[%s215 + $0x58] sm:$0xf]
      %v284 = vld [vmem:[%s215 + $0x5c] sm:$0xf]
      %v285 = vld [vmem:[%s215 + $0x60] sm:$0xf]
      %v286 = vld [vmem:[%s215 + $0x64] sm:$0xf]
      %v287 = vld [vmem:[%s215 + $0x68] sm:$0xf]
      %v288 = vld [vmem:[%s215 + $0x6c] sm:$0xf]
      %v289 = vld [vmem:[%s215 + $0x70] sm:$0xf]
      %v290 = vld [vmem:[%s215 + $0x74] sm:$0xf]
      %v291 = vld [vmem:[%s215 + $0x78] sm:$0xf]
      %v292 = vld [vmem:[%s215 + $0x7c] sm:$0xf]
      %v293 = vld [vmem:[%s215 + $0x80] sm:$0xf]
      %v294 = vld [vmem:[%s215 + $0x84] sm:$0xf]
      %v295 = vld [vmem:[%s215 + $0x88] sm:$0xf]
      %v296 = vld [vmem:[%s215 + $0x8c] sm:$0xf]
      %v297 = vld [vmem:[%s215 + $0x90] sm:$0xf]
      %v298 = vld [vmem:[%s215 + $0x94] sm:$0xf]
      %v299 = vld [vmem:[%s215 + $0x98] sm:$0xf]
      %v300 = vld [vmem:[%s215 + $0x9c] sm:$0xf]
      %v301 = vld [vmem:[%s215 + $0xa0] sm:$0xf]
      %v302 = vld [vmem:[%s215 + $0xa4] sm:$0xf]
      %v303 = vld [vmem:[%s215 + $0xa8] sm:$0xf]
      %v304 = vld [vmem:[%s215 + $0xac] sm:$0xf]
      %v305 = vld [vmem:[%s215 + $0xb0] sm:$0xf]
      %v306 = vld [vmem:[%s215 + $0xb4] sm:$0xf]
      %v307 = vld [vmem:[%s215 + $0xb8] sm:$0xf]
      %v308 = vld [vmem:[%s215 + $0xbc] sm:$0xf]
      %v309 = vld [vmem:[%s218] sm:$0x1]
      %v311 = vlaneseq
      %v312 = vshrl.u32 %v311, 7
      %v313 = vsub.s32 0, %v312
      %v314 = vrot.slane %v309, %v313
      %v348 = vunpack.c.l.b16 %v229
      %v349 = vunpack.c.h.b16 %v229
      %v350 = vunpack.c.l.b16 %v230
      %v351 = vunpack.c.l.b16 %v231
      %v352 = vunpack.c.h.b16 %v231
      %v353 = vunpack.c.l.b16 %v232
      %v354 = vunpack.c.l.b16 %v233
      %v355 = vunpack.c.h.b16 %v233
      %v356 = vunpack.c.l.b16 %v234
      %v357 = vunpack.c.l.b16 %v235
      %v358 = vunpack.c.h.b16 %v235
      %v359 = vunpack.c.l.b16 %v236
      %v360 = vunpack.c.l.b16 %v237
      %v361 = vunpack.c.h.b16 %v237
      %v362 = vunpack.c.l.b16 %v238
      %v363 = vunpack.c.l.b16 %v239
      %v364 = vunpack.c.h.b16 %v239
      %v365 = vunpack.c.l.b16 %v240
      %v366 = vunpack.c.l.b16 %v241
      %v367 = vunpack.c.h.b16 %v241
      %v368 = vunpack.c.l.b16 %v242
      %v369 = vunpack.c.l.b16 %v243
      %v370 = vunpack.c.h.b16 %v243
      %v371 = vunpack.c.l.b16 %v244
      %v372 = vunpack.c.l.b16 %v245
      %v373 = vunpack.c.h.b16 %v245
      %v374 = vunpack.c.l.b16 %v246
      %v375 = vunpack.c.l.b16 %v247
      %v376 = vunpack.c.h.b16 %v247
      %v377 = vunpack.c.l.b16 %v248
      %v378 = vunpack.c.l.b16 %v249
      %v379 = vunpack.c.h.b16 %v249
      %v380 = vunpack.c.l.b16 %v250
      %v381 = vunpack.c.l.b16 %v251
      %v382 = vunpack.c.h.b16 %v251
      %v383 = vunpack.c.l.b16 %v252
      %v384 = vunpack.c.l.b16 %v253
      %v385 = vunpack.c.h.b16 %v253
      %v386 = vunpack.c.l.b16 %v254
      %v387 = vunpack.c.l.b16 %v255
      %v388 = vunpack.c.h.b16 %v255
      %v389 = vunpack.c.l.b16 %v256
      %v390 = vunpack.c.l.b16 %v257
      %v391 = vunpack.c.h.b16 %v257
      %v392 = vunpack.c.l.b16 %v258
      %v393 = vunpack.c.l.b16 %v259
      %v394 = vunpack.c.h.b16 %v259
      %v395 = vunpack.c.l.b16 %v260
      %v396 = vpack.c.b16 %v351, %v348
      %v397 = vpack.c.b16 %v352, %v349
      %v398 = vpack.c.b16 %v353, %v350
      %v399 = vpack.c.b16 %v357, %v354
      %v400 = vpack.c.b16 %v358, %v355
      %v401 = vpack.c.b16 %v359, %v356
      %v402 = vpack.c.b16 %v363, %v360
      %v403 = vpack.c.b16 %v364, %v361
      %v404 = vpack.c.b16 %v365, %v362
      %v405 = vpack.c.b16 %v369, %v366
      %v406 = vpack.c.b16 %v370, %v367
      %v407 = vpack.c.b16 %v371, %v368
      %v408 = vpack.c.b16 %v375, %v372
      %v409 = vpack.c.b16 %v376, %v373
      %v410 = vpack.c.b16 %v377, %v374
      %v411 = vpack.c.b16 %v381, %v378
      %v412 = vpack.c.b16 %v382, %v379
      %v413 = vpack.c.b16 %v383, %v380
      %v414 = vpack.c.b16 %v387, %v384
      %v415 = vpack.c.b16 %v388, %v385
      %v416 = vpack.c.b16 %v389, %v386
      %v417 = vpack.c.b16 %v393, %v390
      %v418 = vpack.c.b16 %v394, %v391
      %v419 = vpack.c.b16 %v395, %v392
      %v492 = vunpack.c.l.b16 %v261
      %v493 = vunpack.c.l.b16 %v262
      %v494 = vunpack.c.l.b16 %v263
      %v495 = vunpack.c.l.b16 %v264
      %v496 = vunpack.c.l.b16 %v265
      %v497 = vunpack.c.l.b16 %v266
      %v498 = vunpack.c.l.b16 %v267
      %v499 = vunpack.c.l.b16 %v268
      %v500 = vunpack.c.l.b16 %v269
      %v501 = vunpack.c.l.b16 %v270
      %v502 = vunpack.c.l.b16 %v271
      %v503 = vunpack.c.l.b16 %v272
      %v504 = vunpack.c.l.b16 %v273
      %v505 = vunpack.c.l.b16 %v274
      %v506 = vunpack.c.l.b16 %v275
      %v507 = vunpack.c.l.b16 %v276
      %v508 = vunpack.c.l.b16 %v277
      %v509 = vunpack.c.l.b16 %v278
      %v510 = vunpack.c.l.b16 %v279
      %v511 = vunpack.c.l.b16 %v280
      %v512 = vunpack.c.l.b16 %v281
      %v513 = vunpack.c.l.b16 %v282
      %v514 = vunpack.c.l.b16 %v283
      %v515 = vunpack.c.l.b16 %v284
      %v516 = vunpack.c.l.b16 %v285
      %v517 = vunpack.c.l.b16 %v286
      %v518 = vunpack.c.l.b16 %v287
      %v519 = vunpack.c.l.b16 %v288
      %v520 = vunpack.c.l.b16 %v289
      %v521 = vunpack.c.l.b16 %v290
      %v522 = vunpack.c.l.b16 %v291
      %v523 = vunpack.c.l.b16 %v292
      %v524 = vunpack.c.l.b16 %v293
      %v525 = vunpack.c.l.b16 %v294
      %v526 = vunpack.c.l.b16 %v295
      %v527 = vunpack.c.l.b16 %v296
      %v528 = vunpack.c.l.b16 %v297
      %v529 = vunpack.c.l.b16 %v298
      %v530 = vunpack.c.l.b16 %v299
      %v531 = vunpack.c.l.b16 %v300
      %v532 = vunpack.c.l.b16 %v301
      %v533 = vunpack.c.l.b16 %v302
      %v534 = vunpack.c.l.b16 %v303
      %v535 = vunpack.c.l.b16 %v304
      %v536 = vunpack.c.l.b16 %v305
      %v537 = vunpack.c.l.b16 %v306
      %v538 = vunpack.c.l.b16 %v307
      %v539 = vunpack.c.l.b16 %v308
      %v540 = vpack.c.b16 %v493, %v492
      %v541 = vpack.c.b16 %v495, %v494
      %v542 = vpack.c.b16 %v497, %v496
      %v543 = vpack.c.b16 %v499, %v498
      %v544 = vpack.c.b16 %v501, %v500
      %v545 = vpack.c.b16 %v503, %v502
      %v546 = vpack.c.b16 %v505, %v504
      %v547 = vpack.c.b16 %v507, %v506
      %v548 = vpack.c.b16 %v509, %v508
      %v549 = vpack.c.b16 %v511, %v510
      %v550 = vpack.c.b16 %v513, %v512
      %v551 = vpack.c.b16 %v515, %v514
      %v552 = vpack.c.b16 %v517, %v516
      %v553 = vpack.c.b16 %v519, %v518
      %v554 = vpack.c.b16 %v521, %v520
      %v555 = vpack.c.b16 %v523, %v522
      %v556 = vpack.c.b16 %v525, %v524
      %v557 = vpack.c.b16 %v527, %v526
      %v558 = vpack.c.b16 %v529, %v528
      %v559 = vpack.c.b16 %v531, %v530
      %v560 = vpack.c.b16 %v533, %v532
      %v561 = vpack.c.b16 %v535, %v534
      %v562 = vpack.c.b16 %v537, %v536
      %v563 = vpack.c.b16 %v539, %v538
      %588 = vmatprep.subr.bf16.mxu0 0
      %589 = vmatpush1.bf16.msra.mxu0 %v540
      %590 = vmatprep.subr.bf16.mxu0 0
      %591 = vmatpush1.bf16.msra.mxu0 %v541
      %592 = vmatprep.subr.bf16.mxu0 0
      %593 = vmatpush1.bf16.msra.mxu0 %v542
      %594 = vmatprep.subr.bf16.mxu0 0
      %595 = vmatpush1.bf16.msra.mxu0 %v543
      %596 = vmatprep.subr.bf16.mxu0 0
      %597 = vmatpush1.bf16.msra.mxu0 %v544
      %598 = vmatprep.subr.bf16.mxu0 0
      %599 = vmatpush1.bf16.msra.mxu0 %v545
      %600 = vmatprep.subr.bf16.mxu0 0
      %601 = vmatpush1.bf16.msra.mxu0 %v546
      %602 = vmatprep.subr.bf16.mxu0 0
      %603 = vmatpush1.bf16.msra.mxu0 %v547
      %604 = vmatprep.subr.bf16.mxu0 0
      %605 = vmatpush1.bf16.msra.mxu0 %v548
      %606 = vmatprep.subr.bf16.mxu0 0
      %607 = vmatpush1.bf16.msra.mxu0 %v549
      %608 = vmatprep.subr.bf16.mxu0 0
      %609 = vmatpush1.bf16.msra.mxu0 %v550
      %610 = vmatprep.subr.bf16.mxu0 0
      %611 = vmatpush1.bf16.msra.mxu0 %v551
      %612 = vmatprep.subr.bf16.mxu0 0
      %613 = vmatpush1.bf16.msra.mxu0 %v552
      %614 = vmatprep.subr.bf16.mxu0 0
      %615 = vmatpush1.bf16.msra.mxu0 %v553
      %616 = vmatprep.subr.bf16.mxu0 0
      %617 = vmatpush1.bf16.msra.mxu0 %v554
      %618 = vmatprep.subr.bf16.mxu0 0
      %619 = vmatpush1.bf16.msra.mxu0 %v555
      %620 = vmatprep.mubr.bf16.mxu0 %v397
      %621 = vmatmul.mubr.bf16.gmra.mrb[0].mxu0 %v396
      %v622 = vpop.f32.mrb[0].mxu0
      %v623 = vadd.f32 %v314, %v622
      %v624 = vpop.f32.mrb[0].mxu0
      %v625 = vpop.f32.mrb[0].mxu0
      %v626 = vadd.f32 %v314, %v625
      %v627 = vpop.f32.mrb[0].mxu0
      %628 = vmatprep.mubr.bf16.mxu0 %v400
      %629 = vmatmul.mubr.bf16.gmra.mrb[0].mxu0 %v399
      %v630 = vpop.f32.mrb[0].mxu0
      %v631 = vadd.f32 %v314, %v630
      %v632 = vpop.f32.mrb[0].mxu0
      %v633 = vpop.f32.mrb[0].mxu0
      %v634 = vadd.f32 %v314, %v633
      %v635 = vpop.f32.mrb[0].mxu0
      %636 = vmatprep.mubr.bf16.mxu0 %v403
      %637 = vmatmul.mubr.bf16.gmra.mrb[0].mxu0 %v402
      %v638 = vpop.f32.mrb[0].mxu0
      %v639 = vadd.f32 %v314, %v638
      %v640 = vpop.f32.mrb[0].mxu0
      %v641 = vpop.f32.mrb[0].mxu0
      %v642 = vadd.f32 %v314, %v641
      %v643 = vpop.f32.mrb[0].mxu0
      %644 = vmatprep.mubr.bf16.mxu0 %v406
      %645 = vmatmul.mubr.bf16.gmra.mrb[0].mxu0 %v405
      %v646 = vpop.f32.mrb[0].mxu0
      %v647 = vadd.f32 %v314, %v646
      %v648 = vpop.f32.mrb[0].mxu0
      %v649 = vpop.f32.mrb[0].mxu0
      %v650 = vadd.f32 %v314, %v649
      %v651 = vpop.f32.mrb[0].mxu0
      %652 = vmatprep.mubr.bf16.mxu0 %v409
      %653 = vmatmul.mubr.bf16.gmra.mrb[0].mxu0 %v408
      %v654 = vpop.f32.mrb[0].mxu0
      %v655 = vadd.f32 %v314, %v654
      %v656 = vpop.f32.mrb[0].mxu0
      %v657 = vpop.f32.mrb[0].mxu0
      %v658 = vadd.f32 %v314, %v657
      %v659 = vpop.f32.mrb[0].mxu0
      %660 = vmatprep.mubr.bf16.mxu0 %v412
      %661 = vmatmul.mubr.bf16.gmra.mrb[0].mxu0 %v411
      %v662 = vpop.f32.mrb[0].mxu0
      %v663 = vadd.f32 %v314, %v662
      %v664 = vpop.f32.mrb[0].mxu0
      %v665 = vpop.f32.mrb[0].mxu0
      %v666 = vadd.f32 %v314, %v665
      %v667 = vpop.f32.mrb[0].mxu0
      %668 = vmatprep.mubr.bf16.mxu0 %v415
      %669 = vmatmul.mubr.bf16.gmra.mrb[0].mxu0 %v414
      %v670 = vpop.f32.mrb[0].mxu0
      %v671 = vadd.f32 %v314, %v670
      %v672 = vpop.f32.mrb[0].mxu0
      %v673 = vpop.f32.mrb[0].mxu0
      %v674 = vadd.f32 %v314, %v673
      %v675 = vpop.f32.mrb[0].mxu0
      %676 = vmatprep.mubr.bf16.mxu0 %v418
      %677 = vmatmul.mubr.bf16.gmra.mrb[0].mxu0 %v417
      %v678 = vpop.f32.mrb[0].mxu0
      %v679 = vadd.f32 %v314, %v678
      %v680 = vpop.f32.mrb[0].mxu0
      %v681 = vpop.f32.mrb[0].mxu0
      %v682 = vadd.f32 %v314, %v681
      %v683 = vpop.f32.mrb[0].mxu0
      %684 = vdwg.mxu0
      %685 = vmatprep.subr.bf16.mxu0 0
      %686 = vmatpush1.bf16.msra.mxu0 %v556
      %687 = vmatprep.subr.bf16.mxu0 0
      %688 = vmatpush1.bf16.msra.mxu0 %v557
      %689 = vmatprep.subr.bf16.mxu0 0
      %690 = vmatpush1.bf16.msra.mxu0 %v558
      %691 = vmatprep.subr.bf16.mxu0 0
      %692 = vmatpush1.bf16.msra.mxu0 %v559
      %693 = vmatprep.subr.bf16.mxu0 0
      %694 = vmatpush1.bf16.msra.mxu0 %v560
      %695 = vmatprep.subr.bf16.mxu0 0
      %696 = vmatpush1.bf16.msra.mxu0 %v561
      %697 = vmatprep.subr.bf16.mxu0 0
      %698 = vmatpush1.bf16.msra.mxu0 %v562
      %699 = vmatprep.subr.bf16.mxu0 0
      %700 = vmatpush1.bf16.msra.mxu0 %v563
      %701 = vmatprep.subr.bf16.mxu0 0
      %702 = vmatpush1.bf16.msra.mxu0 0
      %703 = vmatprep.subr.bf16.mxu0 0
      %704 = vmatpush1.bf16.msra.mxu0 0
      %705 = vmatprep.subr.bf16.mxu0 0
      %706 = vmatpush1.bf16.msra.mxu0 0
      %707 = vmatprep.subr.bf16.mxu0 0
      %708 = vmatpush1.bf16.msra.mxu0 0
      %709 = vmatprep.subr.bf16.mxu0 0
      %710 = vmatpush1.bf16.msra.mxu0 0
      %711 = vmatprep.subr.bf16.mxu0 0
      %712 = vmatpush1.bf16.msra.mxu0 0
      %713 = vmatprep.subr.bf16.mxu0 0
      %714 = vmatpush1.bf16.msra.mxu0 0
      %715 = vmatprep.subr.bf16.mxu0 0
      %716 = vmatpush1.bf16.msra.mxu0 0
      %717 = vmatprep.mubr.bf16.mxu0 0
      %718 = vmatmul.mubr.bf16.gmra.mrb[0].mxu0 %v398
      %v719 = vpop.f32.mrb[0].mxu0
      %v720 = vadd.f32 %v623, %v719
      %v721 = vpop.f32.mrb[0].mxu0
      %v722 = vpop.f32.mrb[0].mxu0
      %v723 = vadd.f32 %v626, %v722
      %v724 = vpop.f32.mrb[0].mxu0
      %725 = vmatprep.mubr.bf16.mxu0 0
      %726 = vmatmul.mubr.bf16.gmra.mrb[0].mxu0 %v401
      %v727 = vpop.f32.mrb[0].mxu0
      %v728 = vadd.f32 %v631, %v727
      %v729 = vpop.f32.mrb[0].mxu0
      %v730 = vpop.f32.mrb[0].mxu0
      %v731 = vadd.f32 %v634, %v730
      %v732 = vpop.f32.mrb[0].mxu0
      %733 = vmatprep.mubr.bf16.mxu0 0
      %734 = vmatmul.mubr.bf16.gmra.mrb[0].mxu0 %v404
      %v735 = vpop.f32.mrb[0].mxu0
      %v736 = vadd.f32 %v639, %v735
      %v737 = vpop.f32.mrb[0].mxu0
      %v738 = vpop.f32.mrb[0].mxu0
      %v739 = vadd.f32 %v642, %v738
      %v740 = vpop.f32.mrb[0].mxu0
      %741 = vmatprep.mubr.bf16.mxu0 0
      %742 = vmatmul.mubr.bf16.gmra.mrb[0].mxu0 %v407
      %v743 = vpop.f32.mrb[0].mxu0
      %v744 = vadd.f32 %v647, %v743
      %v745 = vpop.f32.mrb[0].mxu0
      %v746 = vpop.f32.mrb[0].mxu0
      %v747 = vadd.f32 %v650, %v746
      %v748 = vpop.f32.mrb[0].mxu0
      %749 = vmatprep.mubr.bf16.mxu0 0
      %750 = vmatmul.mubr.bf16.gmra.mrb[0].mxu0 %v410
      %v751 = vpop.f32.mrb[0].mxu0
      %v752 = vadd.f32 %v655, %v751
      %v753 = vpop.f32.mrb[0].mxu0
      %v754 = vpop.f32.mrb[0].mxu0
      %v755 = vadd.f32 %v658, %v754
      %v756 = vpop.f32.mrb[0].mxu0
      %757 = vmatprep.mubr.bf16.mxu0 0
      %758 = vmatmul.mubr.bf16.gmra.mrb[0].mxu0 %v413
      %v759 = vpop.f32.mrb[0].mxu0
      %v760 = vadd.f32 %v663, %v759
      %v761 = vpop.f32.mrb[0].mxu0
      %v762 = vpop.f32.mrb[0].mxu0
      %v763 = vadd.f32 %v666, %v762
      %v764 = vpop.f32.mrb[0].mxu0
      %765 = vmatprep.mubr.bf16.mxu0 0
      %766 = vmatmul.mubr.bf16.gmra.mrb[0].mxu0 %v416
      %v767 = vpop.f32.mrb[0].mxu0
      %v768 = vadd.f32 %v671, %v767
      %v769 = vpop.f32.mrb[0].mxu0
      %v770 = vpop.f32.mrb[0].mxu0
      %v771 = vadd.f32 %v674, %v770
      %v772 = vpop.f32.mrb[0].mxu0
      %773 = vmatprep.mubr.bf16.mxu0 0
      %774 = vmatmul.mubr.bf16.gmra.mrb[0].mxu0 %v419
      %v775 = vpop.f32.mrb[0].mxu0
      %v776 = vadd.f32 %v679, %v775
      %v777 = vpop.f32.mrb[0].mxu0
      %v778 = vpop.f32.mrb[0].mxu0
      %v779 = vadd.f32 %v682, %v778
      %v780 = vpop.f32.mrb[0].mxu0
      %781 = vdwg.mxu0
      %v782 = vmax.f32 %v720, 0.0
      %v783 = vmax.f32 %v723, 0.0
      %v784 = vmax.f32 %v728, 0.0
      %v785 = vmax.f32 %v731, 0.0
      %v786 = vmax.f32 %v736, 0.0
      %v787 = vmax.f32 %v739, 0.0
      %v788 = vmax.f32 %v744, 0.0
      %v789 = vmax.f32 %v747, 0.0
      %v790 = vmax.f32 %v752, 0.0
      %v791 = vmax.f32 %v755, 0.0
      %v792 = vmax.f32 %v760, 0.0
      %v793 = vmax.f32 %v763, 0.0
      %v794 = vmax.f32 %v768, 0.0
      %v795 = vmax.f32 %v771, 0.0
      %v796 = vmax.f32 %v776, 0.0
      %v797 = vmax.f32 %v779, 0.0
      %v798 = vpack.c.bf16 %v783, %v782
      %v799 = vpack.c.bf16 %v785, %v784
      %v800 = vpack.c.bf16 %v787, %v786
      %v801 = vpack.c.bf16 %v789, %v788
      %v802 = vpack.c.bf16 %v791, %v790
      %v803 = vpack.c.bf16 %v793, %v792
      %v804 = vpack.c.bf16 %v795, %v794
      %v805 = vpack.c.bf16 %v797, %v796
      %v814 = vunpack.c.l.b16 %v798
      %v815 = vunpack.c.h.b16 %v798
      %v816 = vunpack.c.l.b16 %v799
      %v817 = vunpack.c.h.b16 %v799
      %v818 = vunpack.c.l.b16 %v800
      %v819 = vunpack.c.h.b16 %v800
      %v820 = vunpack.c.l.b16 %v801
      %v821 = vunpack.c.h.b16 %v801
      %v822 = vunpack.c.l.b16 %v802
      %v823 = vunpack.c.h.b16 %v802
      %v824 = vunpack.c.l.b16 %v803
      %v825 = vunpack.c.h.b16 %v803
      %v826 = vunpack.c.l.b16 %v804
      %v827 = vunpack.c.h.b16 %v804
      %v828 = vunpack.c.l.b16 %v805
      %v829 = vunpack.c.h.b16 %v805
      %v830 = vpack.c.b16 %v814, %v814
      %v831 = vpack.c.b16 %v815, %v815
      %v832 = vpack.c.b16 %v816, %v816
      %v833 = vpack.c.b16 %v817, %v817
      %v834 = vpack.c.b16 %v818, %v818
      %v835 = vpack.c.b16 %v819, %v819
      %v836 = vpack.c.b16 %v820, %v820
      %v837 = vpack.c.b16 %v821, %v821
      %v838 = vpack.c.b16 %v822, %v822
      %v839 = vpack.c.b16 %v823, %v823
      %v840 = vpack.c.b16 %v824, %v824
      %v841 = vpack.c.b16 %v825, %v825
      %v842 = vpack.c.b16 %v826, %v826
      %v843 = vpack.c.b16 %v827, %v827
      %v844 = vpack.c.b16 %v828, %v828
      %v845 = vpack.c.b16 %v829, %v829
      %862 = vst [vmem:[%s226] sm:$0xf] %v830
      %863 = vst [vmem:[%s226 + $0x4] sm:$0xf] %v831
      %864 = vst [vmem:[%s226 + $0x8] sm:$0xf] %v832
      %865 = vst [vmem:[%s226 + $0xc] sm:$0xf] %v833
      %866 = vst [vmem:[%s226 + $0x10] sm:$0xf] %v834
      %867 = vst [vmem:[%s226 + $0x14] sm:$0xf] %v835
      %868 = vst [vmem:[%s226 + $0x18] sm:$0xf] %v836
      %869 = vst [vmem:[%s226 + $0x1c] sm:$0xf] %v837
      %870 = vst [vmem:[%s226 + $0x20] sm:$0xf] %v838
      %871 = vst [vmem:[%s226 + $0x24] sm:$0xf] %v839
      %872 = vst [vmem:[%s226 + $0x28] sm:$0xf] %v840
      %873 = vst [vmem:[%s226 + $0x2c] sm:$0xf] %v841
      %874 = vst [vmem:[%s226 + $0x30] sm:$0xf] %v842
      %875 = vst [vmem:[%s226 + $0x34] sm:$0xf] %v843
      %876 = vst [vmem:[%s226 + $0x38] sm:$0xf] %v844
      %877 = vst [vmem:[%s226 + $0x3c] sm:$0xf] %v845
      %s878 = smul.u32 16, %s18
      %p879 = scmp.lt.s32.totalorder %s878, 63
      %s880 = scalar_select %p879, %s878, 63
      %p881 = scmp.lt.s32.totalorder %s19, 0
      %s882 = scalar_select %p881, %s19, 0
      %s883 = sadd.s32 %s882, %s880
      %s884 = smul.addr %s883, 4
      %s885 = scalar_lea.vmem %s3, %s884
      // Predicated region
      $region33: #{basic_block_forward.2} parent=31 // pred_check
        %p886 = pneg %p124
      $region34: #{basic_block_forward.2} parent=31 // pred_check_branch
        %888 = sbr.rel (%p886) target = $region36
      $region35: #{basic_block_forward.2} parent=31 // pred_region
        %s889 = smul.u32 16, %s18
      $region36: #{basic_block_forward.2} parent=31 // pred_fallthru
        _
    $region32: #{basic_block_forward.2} parent=5 // pred_fallthru
      _
    %p890 = scmp.le.s32.totalorder 2, %s9
    // Predicated region
    $region37: #{basic_block_forward.2} parent=5 // pred_check
      %p891 = pneg %p890
    $region38: #{basic_block_forward.2} parent=5 // pred_check_branch
      %893 = sbr.rel (%p891) target = $region40
    $region39: #{basic_block_forward.2} parent=5 // pred_region
      %s894 = ssub.s32 %s9, 2
      // Predicated region
      $region41: #{basic_block_forward.2} parent=39 // pred_check
        %p895 = pneg %p130
      $region42: #{basic_block_forward.2} parent=39 // pred_check_branch
        %897 = sbr.rel (%p895) target = $region44
      $region43: #{basic_block_forward.2} parent=39 // pred_region
        %s898 = smul.u32 16, %s20
        %p899 = scmp.lt.s32.totalorder %s898, 63
        %s900 = scalar_select %p899, %s898, 63
        %p901 = scmp.lt.s32.totalorder %s21, 0
        %s902 = scalar_select %p901, %s21, 0
        %s903 = sadd.s32 %s902, %s900
        %s904 = smul.addr %s903, 4
        %s905 = scalar_lea.vmem %s3, %s904
      $region44: #{basic_block_forward.2} parent=39 // pred_fallthru
        _
    $region40: #{basic_block_forward.2} parent=5 // pred_fallthru
      _
  $region6: #{basic_block_forward.2} parent=0 // loop_footer
    %s13 = sadd.s32 1, %s9
  $region7: #{basic_block_forward.2} parent=0 // loop_footer_branch
    %8 = sbr.rel target = $region3
  $region8: #{basic_block_forward.2} parent=0 // loop_exit
    _

// kernel: basic_block_forward.3
$region0: #{basic_block_forward.3}
  #allocation0 [shape = 'u32[]', space=smem, size = 0x4, offset = 0x4, fixed_abs, tag = 'smem constant byte address 0x4 - core index']
  #allocation1 [shape = 'u32[144,128]{1,0:T(1,128)}', space=vmem, size = 0x12000, scoped, tag = 'internal scratch']
  %s0 = inlined_call_operand.vmem [shape: bf16[512,640], index: 0, kind: input, shape index: {}]
  %s1 = inlined_call_operand.vmem [shape: bf16[640,128], index: 1, kind: input, shape index: {}]
  %s2 = inlined_call_operand.vmem [shape: f32[1,128], index: 2, kind: input, shape index: {}]
  %s3 = inlined_call_operand.vmem [shape: bf16[512,128], index: 3, kind: input, shape index: {}]
  %s4 = inlined_call_operand.vmem [shape: bf16[128,128], index: 4, kind: input, shape index: {}]
  %s5 = inlined_call_operand.vmem [shape: f32[1,128], index: 5, kind: input, shape index: {}]
  %s6 = inlined_call_operand.hbm [shape: f32[512,128], index: 6, kind: output, shape index: {}]
  %s7 = sld [smem:[#allocation0]]
  $region57: #{basic_block_forward.3} parent=0
    _
  %s9 = ssub.s32 1, %s7
  %s10 = scalar_select 0, %s9, %s7
  $region1: #{basic_block_forward.3} parent=0
    #allocation2 [shape = 'u8[131072]{0}', space=vmem, size = 0x20000, scoped, tag = 'output window, operand 0']
    #allocation3 [shape = 's32[2]{0}', space=sflag, size = 0x8, scoped, tag = 'scoped memory for basic_block_forward.3']
    %11 = vsyncpa [#allocation3], 0
    %s12 = scalar_lea.sflag [#allocation3], 1
    %13 = vsyncpa %s12, 0
    loop: start=0, step=1, limit=6
    $region2: #{basic_block_forward.3} parent=1 // loop_pre_header
      _
    $region3: #{basic_block_forward.3} parent=1 // loop_header
      %s15 = sphi 0, %s19
      %p16 = scmp.ge.s32.totalorder %s15, 6
      %s22 = sphi 0, %s34
      %s23 = sphi 0, %s30
      %s24 = sphi 0, %s22
      %s25 = sphi 0, %s23
      %s26 = sphi 0, %s24
      %s27 = sphi 0, %s25
      %s37 = sphi 0, %s39
      %s40 = sphi 0, %s37
      %s41 = sphi 0, %s40
      %s57 = sphi 0, %s41
      %s63 = sphi 0, %s65
      %s66 = sphi 0, %s63
      %s67 = sphi 0, %s66
      %s83 = sphi 0, %s67
      %s89 = sphi 0, %s91
      %s92 = sphi 0, %s89
      %s93 = sphi 0, %s92
      %s109 = sphi 0, %s93
      %s115 = sphi 0, %s117
      %s118 = sphi 0, %s115
      %s119 = sphi 0, %s118
      %s135 = sphi 0, %s119
      %s141 = sphi 0, %s143
      %s144 = sphi 0, %s141
      %s145 = sphi 0, %s144
      %s161 = sphi 0, %s145
      %s167 = sphi 0, %s169
      %s170 = sphi 0, %s167
      %s171 = sphi 0, %s170
      %s187 = sphi 0, %s171
      %s195 = sphi 0, %s197
      %s198 = sphi 0, %s195
      %s199 = sphi 0, %s198
      %s215 = sphi 0, %s199
    $region4: #{basic_block_forward.3} parent=1 // loop_header_branch
      %18 = sbr.rel (%p16) target = $region8
    $region5: #{basic_block_forward.3} parent=1 // loop_body
      %s20 = ssub.s32 %s15, 1
      %s21 = ssub.s32 %s15, 2
      %s28 = sadd.s32 1, %s23
      %p29 = scmp.ge.s32.totalorder %s28, 1
      %s30 = scalar_select %p29, 0, %s28
      %s31 = sadd.s32 1, %s22
      %s32 = scalar_select %p29, %s31, %s22
      %p33 = scmp.ge.s32.totalorder %s32, 4
      %s34 = scalar_select %p33, 0, %s32
      %s35 = ssub.s32 %s22, %s34
      %p36 = scmp.eq.s32.totalorder %s35, 0
      %s38 = sadd.s32 %s37, 1
      %s39 = scalar_select %p36, %s37, %s38
      %p42 = pneg %p36
      %p43 = scmp.eq.s32.totalorder %s15, 3
      %p44 = por %p42, %p43
      %p45 = scmp.ne.s32.totalorder %s37, %s40
      %p46 = scmp.eq.s32.totalorder %s15, 0
      %p47 = por %p45, %p46
      %p48 = scmp.ne.s32.totalorder %s37, %s40
      %p49 = scmp.eq.s32.totalorder %s20, 3
      %p50 = por %p48, %p49
      %p51 = scmp.ne.s32.totalorder %s40, %s41
      %p52 = scmp.eq.s32.totalorder %s20, 0
      %p53 = por %p51, %p52
      %p54 = scmp.ne.s32.totalorder %s40, %s41
      %p55 = scmp.eq.s32.totalorder %s21, 3
      %p56 = por %p54, %p55
      %p58 = scmp.ne.s32.totalorder %s41, %s57
      %p59 = scmp.eq.s32.totalorder %s21, 0
      %p60 = por %p58, %p59
      %s61 = ssub.s32 %s23, %s30
      %p62 = scmp.eq.s32.totalorder %s61, 0
      %s64 = sadd.s32 %s63, 1
      %s65 = scalar_select %p62, %s63, %s64
      %p68 = pneg %p62
      %p69 = scmp.eq.s32.totalorder %s15, 3
      %p70 = por %p68, %p69
      %p71 = scmp.ne.s32.totalorder %s63, %s66
      %p72 = scmp.eq.s32.totalorder %s15, 0
      %p73 = por %p71, %p72
      %p74 = scmp.ne.s32.totalorder %s63, %s66
      %p75 = scmp.eq.s32.totalorder %s20, 3
      %p76 = por %p74, %p75
      %p77 = scmp.ne.s32.totalorder %s66, %s67
      %p78 = scmp.eq.s32.totalorder %s20, 0
      %p79 = por %p77, %p78
      %p80 = scmp.ne.s32.totalorder %s66, %s67
      %p81 = scmp.eq.s32.totalorder %s21, 3
      %p82 = por %p80, %p81
      %p84 = scmp.ne.s32.totalorder %s67, %s83
      %p85 = scmp.eq.s32.totalorder %s21, 0
      %p86 = por %p84, %p85
      %s87 = ssub.s32 %s23, %s30
      %p88 = scmp.eq.s32.totalorder %s87, 0
      %s90 = sadd.s32 %s89, 1
      %s91 = scalar_select %p88, %s89, %s90
      %p94 = pneg %p88
      %p95 = scmp.eq.s32.totalorder %s15, 3
      %p96 = por %p94, %p95
      %p97 = scmp.ne.s32.totalorder %s89, %s92
      %p98 = scmp.eq.s32.totalorder %s15, 0
      %p99 = por %p97, %p98
      %p100 = scmp.ne.s32.totalorder %s89, %s92
      %p101 = scmp.eq.s32.totalorder %s20, 3
      %p102 = por %p100, %p101
      %p103 = scmp.ne.s32.totalorder %s92, %s93
      %p104 = scmp.eq.s32.totalorder %s20, 0
      %p105 = por %p103, %p104
      %p106 = scmp.ne.s32.totalorder %s92, %s93
      %p107 = scmp.eq.s32.totalorder %s21, 3
      %p108 = por %p106, %p107
      %p110 = scmp.ne.s32.totalorder %s93, %s109
      %p111 = scmp.eq.s32.totalorder %s21, 0
      %p112 = por %p110, %p111
      %s113 = ssub.s32 %s22, %s34
      %p114 = scmp.eq.s32.totalorder %s113, 0
      %s116 = sadd.s32 %s115, 1
      %s117 = scalar_select %p114, %s115, %s116
      %p120 = pneg %p114
      %p121 = scmp.eq.s32.totalorder %s15, 3
      %p122 = por %p120, %p121
      %p123 = scmp.ne.s32.totalorder %s115, %s118
      %p124 = scmp.eq.s32.totalorder %s15, 0
      %p125 = por %p123, %p124
      %p126 = scmp.ne.s32.totalorder %s115, %s118
      %p127 = scmp.eq.s32.totalorder %s20, 3
      %p128 = por %p126, %p127
      %p129 = scmp.ne.s32.totalorder %s118, %s119
      %p130 = scmp.eq.s32.totalorder %s20, 0
      %p131 = por %p129, %p130
      %p132 = scmp.ne.s32.totalorder %s118, %s119
      %p133 = scmp.eq.s32.totalorder %s21, 3
      %p134 = por %p132, %p133
      %p136 = scmp.ne.s32.totalorder %s119, %s135
      %p137 = scmp.eq.s32.totalorder %s21, 0
      %p138 = por %p136, %p137
      %s139 = ssub.s32 %s23, %s30
      %p140 = scmp.eq.s32.totalorder %s139, 0
      %s142 = sadd.s32 %s141, 1
      %s143 = scalar_select %p140, %s141, %s142
      %p146 = pneg %p140
      %p147 = scmp.eq.s32.totalorder %s15, 3
      %p148 = por %p146, %p147
      %p149 = scmp.ne.s32.totalorder %s141, %s144
      %p150 = scmp.eq.s32.totalorder %s15, 0
      %p151 = por %p149, %p150
      %p152 = scmp.ne.s32.totalorder %s141, %s144
      %p153 = scmp.eq.s32.totalorder %s20, 3
      %p154 = por %p152, %p153
      %p155 = scmp.ne.s32.totalorder %s144, %s145
      %p156 = scmp.eq.s32.totalorder %s20, 0
      %p157 = por %p155, %p156
      %p158 = scmp.ne.s32.totalorder %s144, %s145
      %p159 = scmp.eq.s32.totalorder %s21, 3
      %p160 = por %p158, %p159
      %p162 = scmp.ne.s32.totalorder %s145, %s161
      %p163 = scmp.eq.s32.totalorder %s21, 0
      %p164 = por %p162, %p163
      %s165 = ssub.s32 %s23, %s30
      %p166 = scmp.eq.s32.totalorder %s165, 0
      %s168 = sadd.s32 %s167, 1
      %s169 = scalar_select %p166, %s167, %s168
      %p172 = pneg %p166
      %p173 = scmp.eq.s32.totalorder %s15, 3
      %p174 = por %p172, %p173
      %p175 = scmp.ne.s32.totalorder %s167, %s170
      %p176 = scmp.eq.s32.totalorder %s15, 0
      %p177 = por %p175, %p176
      %p178 = scmp.ne.s32.totalorder %s167, %s170
      %p179 = scmp.eq.s32.totalorder %s20, 3
      %p180 = por %p178, %p179
      %p181 = scmp.ne.s32.totalorder %s170, %s171
      %p182 = scmp.eq.s32.totalorder %s20, 0
      %p183 = por %p181, %p182
      %p184 = scmp.ne.s32.totalorder %s170, %s171
      %p185 = scmp.eq.s32.totalorder %s21, 3
      %p186 = por %p184, %p185
      %p188 = scmp.ne.s32.totalorder %s171, %s187
      %p189 = scmp.eq.s32.totalorder %s21, 0
      %p190 = por %p188, %p189
      %s191 = ssub.s32 %s22, %s34
      %s192 = ssub.s32 %s23, %s30
      %s193 = sor.u32 %s191, %s192
      %p194 = scmp.eq.s32.totalorder %s193, 0
      %s196 = sadd.s32 %s195, 1
      %s197 = scalar_select %p194, %s195, %s196
      %p200 = pneg %p194
      %p201 = scmp.eq.s32.totalorder %s15, 3
      %p202 = por %p200, %p201
      %p203 = scmp.ne.s32.totalorder %s195, %s198
      %p204 = scmp.eq.s32.totalorder %s15, 0
      %p205 = por %p203, %p204
      %p206 = scmp.ne.s32.totalorder %s195, %s198
      %p207 = scmp.eq.s32.totalorder %s20, 3
      %p208 = por %p206, %p207
      %p209 = scmp.ne.s32.totalorder %s198, %s199
      %p210 = scmp.eq.s32.totalorder %s20, 0
      %p211 = por %p209, %p210
      %p212 = scmp.ne.s32.totalorder %s198, %s199
      %p213 = scmp.eq.s32.totalorder %s21, 3
      %p214 = por %p212, %p213
      %p216 = scmp.ne.s32.totalorder %s199, %s215
      %p217 = scmp.eq.s32.totalorder %s21, 0
      %p218 = por %p216, %p217
      %p219 = scmp.le.s32.totalorder 1, %s15
      %p220 = scmp.lt.s32.totalorder %s15, 5
      %p221 = pnand %p219, %p220
      %p222 = pneg %p221
      // Predicated region
      $region9: #{basic_block_forward.3} parent=5 // pred_check
        _
      $region10: #{basic_block_forward.3} parent=5 // pred_check_branch
        %224 = sbr.rel (%p221) target = $region12
      $region11: #{basic_block_forward.3} parent=5 // pred_region
        %s225 = ssub.s32 %s15, 1
        // Predicated region
        $region13: #{basic_block_forward.3} parent=11 // pred_check
          %p226 = pneg %p79
        $region14: #{basic_block_forward.3} parent=11 // pred_check_branch
          %228 = sbr.rel (%p226) target = $region16
        $region15: #{basic_block_forward.3} parent=11 // pred_region
          %p229 = scmp.lt.s32.totalorder %s25, 0
          %s230 = scalar_select %p229, %s25, 0
          %s231 = smul.addr %s230, 4
          %s232 = scalar_lea.vmem %s1, %s231
        $region16: #{basic_block_forward.3} parent=11 // pred_fallthru
          _
        // Predicated region
        $region17: #{basic_block_forward.3} parent=11 // pred_check
          %p233 = pneg %p105
        $region18: #{basic_block_forward.3} parent=11 // pred_check_branch
          %235 = sbr.rel (%p233) target = $region20
        $region19: #{basic_block_forward.3} parent=11 // pred_region
          %p236 = scmp.lt.s32.totalorder %s25, 0
          %s237 = scalar_select %p236, %s25, 0
          %s238 = scalar_lea.vmem %s2, %s237
        $region20: #{basic_block_forward.3} parent=11 // pred_fallthru
          _
        // Predicated region
        $region21: #{basic_block_forward.3} parent=11 // pred_check
          %p239 = pneg %p157
        $region22: #{basic_block_forward.3} parent=11 // pred_check_branch
          %241 = sbr.rel (%p239) target = $region24
        $region23: #{basic_block_forward.3} parent=11 // pred_region
          %p242 = scmp.lt.s32.totalorder %s25, 0
          %s243 = scalar_select %p242, %s25, 0
          %s244 = smul.addr %s243, 4
          %s245 = scalar_lea.vmem %s4, %s244
        $region24: #{basic_block_forward.3} parent=11 // pred_fallthru
          _
        // Predicated region
        $region25: #{basic_block_forward.3} parent=11 // pred_check
          %p246 = pneg %p183
        $region26: #{basic_block_forward.3} parent=11 // pred_check_branch
          %248 = sbr.rel (%p246) target = $region28
        $region27: #{basic_block_forward.3} parent=11 // pred_region
          %p249 = scmp.lt.s32.totalorder %s25, 0
          %s250 = scalar_select %p249, %s25, 0
          %s251 = scalar_lea.vmem %s5, %s250
        $region28: #{basic_block_forward.3} parent=11 // pred_fallthru
          _
      $region12: #{basic_block_forward.3} parent=5 // pred_fallthru
        _
      %p252 = scmp.lt.s32.totalorder %s15, 4
      // Predicated region
      $region29: #{basic_block_forward.3} parent=5 // pred_check
        %p253 = pneg %p252
      $region30: #{basic_block_forward.3} parent=5 // pred_check_branch
        %255 = sbr.rel (%p253) target = $region32
      $region31: #{basic_block_forward.3} parent=5 // pred_region
        // Predicated region
        $region33: #{basic_block_forward.3} parent=31 // pred_check
          %p256 = pneg %p47
        $region34: #{basic_block_forward.3} parent=31 // pred_check_branch
          %258 = sbr.rel (%p256) target = $region36
        $region35: #{basic_block_forward.3} parent=31 // pred_region
          %s259 = smul.u32 16, %s22
          %p260 = scmp.lt.s32.totalorder %s259, 63
          %s261 = scalar_select %p260, %s259, 63
          %s262 = smul.addr %s261, 5
          %s263 = smul.addr %s262, 4
          %s264 = scalar_lea.vmem %s0, %s263
          %s265 = smul.u32 16, %s22
        $region36: #{basic_block_forward.3} parent=31 // pred_fallthru
          _
        // Predicated region
        $region37: #{basic_block_forward.3} parent=31 // pred_check
          %p266 = pneg %p125
        $region38: #{basic_block_forward.3} parent=31 // pred_check_branch
          %268 = sbr.rel (%p266) target = $region40
        $region39: #{basic_block_forward.3} parent=31 // pred_region
          %s269 = smul.u32 16, %s22
          %p270 = scmp.lt.s32.totalorder %s269, 63
          %s271 = scalar_select %p270, %s269, 63
          %s272 = smul.addr %s271, 4
          %s273 = scalar_lea.vmem %s3, %s272
          %s274 = smul.u32 16, %s22
        $region40: #{basic_block_forward.3} parent=31 // pred_fallthru
          _
      $region32: #{basic_block_forward.3} parent=5 // pred_fallthru
        _
      %p275 = scmp.le.s32.totalorder 1, %s15
      %p276 = scmp.lt.s32.totalorder %s15, 5
      %p277 = pnand %p275, %p276
      %p278 = pneg %p277
      // Predicated region
      $region41: #{basic_block_forward.3} parent=5 // pred_check
        _
      $region42: #{basic_block_forward.3} parent=5 // pred_check_branch
        %280 = sbr.rel (%p277) target = $region44
      $region43: #{basic_block_forward.3} parent=5 // pred_region
        %s281 = ssub.s32 %s15, 1
        %s282 = smul.u32 16, %s24
        %p283 = scmp.lt.s32.totalorder %s282, 63
        %s284 = scalar_select %p283, %s282, 63
        %s285 = smul.addr %s284, 5
        %s286 = smul.addr %s285, 4
        %s287 = scalar_lea.vmem %s0, %s286
        %p288 = pneg %p53
        %p289 = pneg %p50
        %p290 = scmp.lt.s32.totalorder %s25, 0
        %s291 = scalar_select %p290, %s25, 0
        %s292 = smul.addr %s291, 4
        %s293 = scalar_lea.vmem %s1, %s292
        %p294 = pneg %p79
        %p295 = pneg %p76
        %p296 = scmp.lt.s32.totalorder %s25, 0
        %s297 = scalar_select %p296, %s25, 0
        %s298 = scalar_lea.vmem %s2, %s297
        %p299 = pneg %p105
        %p300 = pneg %p102
        %s301 = smul.u32 16, %s24
        %p302 = scmp.lt.s32.totalorder %s301, 63
        %s303 = scalar_select %p302, %s301, 63
        %s304 = smul.addr %s303, 4
        %s305 = scalar_lea.vmem %s3, %s304
        %p306 = pneg %p131
        %p307 = pneg %p128
        %p308 = scmp.lt.s32.totalorder %s25, 0
        %s309 = scalar_select %p308, %s25, 0
        %s310 = smul.addr %s309, 4
        %s311 = scalar_lea.vmem %s4, %s310
        %p312 = pneg %p157
        %p313 = pneg %p154
        %p314 = scmp.lt.s32.totalorder %s25, 0
        %s315 = scalar_select %p314, %s25, 0
        %s316 = scalar_lea.vmem %s5, %s315
        %p317 = pneg %p183
        %p318 = pneg %p180
        %p319 = pneg %p211
        %p320 = pneg %p208
        %s321 = sand.u32 %s198, 1
        %s322 = scalar_lea.sflag [#allocation3], %s321
        %s323 = sand.u32 %s198, 1
        %s324 = smul.addr %s323, 128
        %s325 = scalar_lea.vmem [#allocation2], %s324
        %s326 = smul.u32 16, %s24
        %p327 = scmp.lt.s32.totalorder %s326, 63
        %s328 = scalar_select %p327, %s326, 63
        %s329 = smul.addr %s328, 5
        %s330 = smul.addr %s329, 4
        %s331 = scalar_lea.vmem %s0, %s330
        %s332 = smul.u32 16, %s24
        %p333 = scmp.lt.s32.totalorder %s25, 0
        %s334 = scalar_select %p333, %s25, 0
        %s335 = smul.addr %s334, 4
        %s336 = scalar_lea.vmem %s1, %s335
        %p337 = scmp.lt.s32.totalorder %s25, 0
        %s338 = scalar_select %p337, %s25, 0
        %s339 = scalar_lea.vmem %s2, %s338
        %s340 = smul.u32 16, %s24
        %p341 = scmp.lt.s32.totalorder %s340, 63
        %s342 = scalar_select %p341, %s340, 63
        %s343 = smul.addr %s342, 4
        %s344 = scalar_lea.vmem %s3, %s343
        %s345 = smul.u32 16, %s24
        %p346 = scmp.lt.s32.totalorder %s25, 0
        %s347 = scalar_select %p346, %s25, 0
        %s348 = smul.addr %s347, 4
        %s349 = scalar_lea.vmem %s4, %s348
        %p350 = scmp.lt.s32.totalorder %s25, 0
        %s351 = scalar_select %p350, %s25, 0
        %s352 = scalar_lea.vmem %s5, %s351
        %s353 = smul.u32 16, %s24
        %v355 = vld [vmem:[%s331] sm:$0xff]
        %v356 = vld [vmem:[%s331 + $0x8] sm:$0xff]
        %v357 = vld [vmem:[%s331 + $0x10] sm:$0xf]
        %v358 = vld [vmem:[%s331 + $0x14] sm:$0xff]
        %v359 = vld [vmem:[%s331 + $0x1c] sm:$0xff]
        %v360 = vld [vmem:[%s331 + $0x24] sm:$0xf]
        %v361 = vld [vmem:[%s331 + $0x28] sm:$0xff]
        %v362 = vld [vmem:[%s331 + $0x30] sm:$0xff]
        %v363 = vld [vmem:[%s331 + $0x38] sm:$0xf]
        %v364 = vld [vmem:[%s331 + $0x3c] sm:$0xff]
        %v365 = vld [vmem:[%s331 + $0x44] sm:$0xff]
        %v366 = vld [vmem:[%s331 + $0x4c] sm:$0xf]
        %v367 = vld [vmem:[%s331 + $0x50] sm:$0xff]
        %v368 = vld [vmem:[%s331 + $0x58] sm:$0xff]
        %v369 = vld [vmem:[%s331 + $0x60] sm:$0xf]
        %v370 = vld [vmem:[%s331 + $0x64] sm:$0xff]
        %v371 = vld [vmem:[%s331 + $0x6c] sm:$0xff]
        %v372 = vld [vmem:[%s331 + $0x74] sm:$0xf]
        %v373 = vld [vmem:[%s331 + $0x78] sm:$0xff]
        %v374 = vld [vmem:[%s331 + $0x80] sm:$0xff]
        %v375 = vld [vmem:[%s331 + $0x88] sm:$0xf]
        %v376 = vld [vmem:[%s331 + $0x8c] sm:$0xff]
        %v377 = vld [vmem:[%s331 + $0x94] sm:$0xff]
        %v378 = vld [vmem:[%s331 + $0x9c] sm:$0xf]
        %v379 = vld [vmem:[%s331 + $0xa0] sm:$0xff]
        %v380 = vld [vmem:[%s331 + $0xa8] sm:$0xff]
        %v381 = vld [vmem:[%s331 + $0xb0] sm:$0xf]
        %v382 = vld [vmem:[%s331 + $0xb4] sm:$0xff]
        %v383 = vld [vmem:[%s331 + $0xbc] sm:$0xff]
        %v384 = vld [vmem:[%s331 + $0xc4] sm:$0xf]
        %v385 = vld [vmem:[%s331 + $0xc8] sm:$0xff]
        %v386 = vld [vmem:[%s331 + $0xd0] sm:$0xff]
        %v387 = vld [vmem:[%s331 + $0xd8] sm:$0xf]
        %v388 = vld [vmem:[%s331 + $0xdc] sm:$0xff]
        %v389 = vld [vmem:[%s331 + $0xe4] sm:$0xff]
        %v390 = vld [vmem:[%s331 + $0xec] sm:$0xf]
        %v391 = vld [vmem:[%s331 + $0xf0] sm:$0xff]
        %v392 = vld [vmem:[%s331 + $0xf8] sm:$0xff]
        %v393 = vld [vmem:[%s331 + $0x100] sm:$0xf]
        %v394 = vld [vmem:[%s331 + $0x104] sm:$0xff]
        %v395 = vld [vmem:[%s331 + $0x10c] sm:$0xff]
        %v396 = vld [vmem:[%s331 + $0x114] sm:$0xf]
        %v397 = vld [vmem:[%s331 + $0x118] sm:$0xff]
        %v398 = vld [vmem:[%s331 + $0x120] sm:$0xff]
        %v399 = vld [vmem:[%s331 + $0x128] sm:$0xf]
        %v400 = vld [vmem:[%s331 + $0x12c] sm:$0xff]
        %v401 = vld [vmem:[%s331 + $0x134] sm:$0xff]
        %v402 = vld [vmem:[%s331 + $0x13c] sm:$0xf]
        %v403 = vld [vmem:[%s336] sm:$0xf]
        %v404 = vld [vmem:[%s336 + $0x4] sm:$0xf]
        %v405 = vld [vmem:[%s336 + $0x8] sm:$0xf]
        %v406 = vld [vmem:[%s336 + $0xc] sm:$0xf]
        %v407 = vld [vmem:[%s336 + $0x10] sm:$0xf]
        %v408 = vld [vmem:[%s336 + $0x14] sm:$0xf]
        %v409 = vld [vmem:[%s336 + $0x18] sm:$0xf]
        %v410 = vld [vmem:[%s336 + $0x1c] sm:$0xf]
        %v411 = vld [vmem:[%s336 + $0x20] sm:$0xf]
        %v412 = vld [vmem:[%s336 + $0x24] sm:$0xf]
        %v413 = vld [vmem:[%s336 + $0x28] sm:$0xf]
        %v414 = vld [vmem:[%s336 + $0x2c] sm:$0xf]
        %v415 = vld [vmem:[%s336 + $0x30] sm:$0xf]
        %v416 = vld [vmem:[%s336 + $0x34] sm:$0xf]
        %v417 = vld [vmem:[%s336 + $0x38] sm:$0xf]
        %v418 = vld [vmem:[%s336 + $0x3c] sm:$0xf]
        %v419 = vld [vmem:[%s336 + $0x40] sm:$0xf]
        %v420 = vld [vmem:[%s336 + $0x44] sm:$0xf]
        %v421 = vld [vmem:[%s336 + $0x48] sm:$0xf]
        %v422 = vld [vmem:[%s336 + $0x4c] sm:$0xf]
        %v423 = vld [vmem:[%s336 + $0x50] sm:$0xf]
        %v424 = vld [vmem:[%s336 + $0x54] sm:$0xf]
        %v425 = vld [vmem:[%s336 + $0x58] sm:$0xf]
        %v426 = vld [vmem:[%s336 + $0x5c] sm:$0xf]
        %v427 = vld [vmem:[%s336 + $0x60] sm:$0xf]
        %v428 = vld [vmem:[%s336 + $0x64] sm:$0xf]
        %v429 = vld [vmem:[%s336 + $0x68] sm:$0xf]
        %v430 = vld [vmem:[%s336 + $0x6c] sm:$0xf]
        %v431 = vld [vmem:[%s336 + $0x70] sm:$0xf]
        %v432 = vld [vmem:[%s336 + $0x74] sm:$0xf]
        %v433 = vld [vmem:[%s336 + $0x78] sm:$0xf]
        %v434 = vld [vmem:[%s336 + $0x7c] sm:$0xf]
        %v435 = vld [vmem:[%s336 + $0x80] sm:$0xf]
        %v436 = vld [vmem:[%s336 + $0x84] sm:$0xf]
        %v437 = vld [vmem:[%s336 + $0x88] sm:$0xf]
        %v438 = vld [vmem:[%s336 + $0x8c] sm:$0xf]
        %v439 = vld [vmem:[%s336 + $0x90] sm:$0xf]
        %v440 = vld [vmem:[%s336 + $0x94] sm:$0xf]
        %v441 = vld [vmem:[%s336 + $0x98] sm:$0xf]
        %v442 = vld [vmem:[%s336 + $0x9c] sm:$0xf]
        %v443 = vld [vmem:[%s336 + $0xa0] sm:$0xf]
        %v444 = vld [vmem:[%s336 + $0xa4] sm:$0xf]
        %v445 = vld [vmem:[%s336 + $0xa8] sm:$0xf]
        %v446 = vld [vmem:[%s336 + $0xac] sm:$0xf]
        %v447 = vld [vmem:[%s336 + $0xb0] sm:$0xf]
        %v448 = vld [vmem:[%s336 + $0xb4] sm:$0xf]
        %v449 = vld [vmem:[%s336 + $0xb8] sm:$0xf]
        %v450 = vld [vmem:[%s336 + $0xbc] sm:$0xf]
        %v451 = vld [vmem:[%s336 + $0xc0] sm:$0xf]
        %v452 = vld [vmem:[%s336 + $0xc4] sm:$0xf]
        %v453 = vld [vmem:[%s336 + $0xc8] sm:$0xf]
        %v454 = vld [vmem:[%s336 + $0xcc] sm:$0xf]
        %v455 = vld [vmem:[%s336 + $0xd0] sm:$0xf]
        %v456 = vld [vmem:[%s336 + $0xd4] sm:$0xf]
        %v457 = vld [vmem:[%s336 + $0xd8] sm:$0xf]
        %v458 = vld [vmem:[%s336 + $0xdc] sm:$0xf]
        %v459 = vld [vmem:[%s336 + $0xe0] sm:$0xf]
        %v460 = vld [vmem:[%s336 + $0xe4] sm:$0xf]
        %v461 = vld [vmem:[%s336 + $0xe8] sm:$0xf]
        %v462 = vld [vmem:[%s336 + $0xec] sm:$0xf]
        %v463 = vld [vmem:[%s336 + $0xf0] sm:$0xf]
        %v464 = vld [vmem:[%s336 + $0xf4] sm:$0xf]
        %v465 = vld [vmem:[%s336 + $0xf8] sm:$0xf]
        %v466 = vld [vmem:[%s336 + $0xfc] sm:$0xf]
        %v467 = vld [vmem:[%s336 + $0x100] sm:$0xf]
        %v468 = vld [vmem:[%s336 + $0x104] sm:$0xf]
        %v469 = vld [vmem:[%s336 + $0x108] sm:$0xf]
        %v470 = vld [vmem:[%s336 + $0x10c] sm:$0xf]
        %v471 = vld [vmem:[%s336 + $0x110] sm:$0xf]
        %v472 = vld [vmem:[%s336 + $0x114] sm:$0xf]
        %v473 = vld [vmem:[%s336 + $0x118] sm:$0xf]
        %v474 = vld [vmem:[%s336 + $0x11c] sm:$0xf]
        %v475 = vld [vmem:[%s336 + $0x120] sm:$0xf]
        %v476 = vld [vmem:[%s336 + $0x124] sm:$0xf]
        %v477 = vld [vmem:[%s336 + $0x128] sm:$0xf]
        %v478 = vld [vmem:[%s336 + $0x12c] sm:$0xf]
        %v479 = vld [vmem:[%s336 + $0x130] sm:$0xf]
        %v480 = vld [vmem:[%s336 + $0x134] sm:$0xf]
        %v481 = vld [vmem:[%s336 + $0x138] sm:$0xf]
        %v482 = vld [vmem:[%s336 + $0x13c] sm:$0xf]
        %v483 = vld [vmem:[%s339] sm:$0x1]
        %v485 = vlaneseq
        %v486 = vshrl.u32 %v485, 7
        %v487 = vsub.s32 0, %v486
        %v488 = vrot.slane %v483, %v487
        %v538 = vunpack.c.l.b16 %v355
        %v539 = vunpack.c.h.b16 %v355
        %v540 = vunpack.c.l.b16 %v356
        %v541 = vunpack.c.h.b16 %v356
        %v542 = vunpack.c.l.b16 %v357
        %v543 = vunpack.c.l.b16 %v358
        %v544 = vunpack.c.h.b16 %v358
        %v545 = vunpack.c.l.b16 %v359
        %v546 = vunpack.c.h.b16 %v359
        %v547 = vunpack.c.l.b16 %v360
        %v548 = vunpack.c.l.b16 %v361
        %v549 = vunpack.c.h.b16 %v361
        %v550 = vunpack.c.l.b16 %v362
        %v551 = vunpack.c.h.b16 %v362
        %v552 = vunpack.c.l.b16 %v363
        %v553 = vunpack.c.l.b16 %v364
        %v554 = vunpack.c.h.b16 %v364
        %v555 = vunpack.c.l.b16 %v365
        %v556 = vunpack.c.h.b16 %v365
        %v557 = vunpack.c.l.b16 %v366
        %v558 = vunpack.c.l.b16 %v367
        %v559 = vunpack.c.h.b16 %v367
        %v560 = vunpack.c.l.b16 %v368
        %v561 = vunpack.c.h.b16 %v368
        %v562 = vunpack.c.l.b16 %v369
        %v563 = vunpack.c.l.b16 %v370
        %v564 = vunpack.c.h.b16 %v370
        %v565 = vunpack.c.l.b16 %v371
        %v566 = vunpack.c.h.b16 %v371
        %v567 = vunpack.c.l.b16 %v372
        %v568 = vunpack.c.l.b16 %v373
        %v569 = vunpack.c.h.b16 %v373
        %v570 = vunpack.c.l.b16 %v374
        %v571 = vunpack.c.h.b16 %v374
        %v572 = vunpack.c.l.b16 %v375
        %v573 = vunpack.c.l.b16 %v376
        %v574 = vunpack.c.h.b16 %v376
        %v575 = vunpack.c.l.b16 %v377
        %v576 = vunpack.c.h.b16 %v377
        %v577 = vunpack.c.l.b16 %v378
        %v578 = vunpack.c.l.b16 %v379
        %v579 = vunpack.c.h.b16 %v379
        %v580 = vunpack.c.l.b16 %v380
        %v581 = vunpack.c.h.b16 %v380
        %v582 = vunpack.c.l.b16 %v381
        %v583 = vunpack.c.l.b16 %v382
        %v584 = vunpack.c.h.b16 %v382
        %v585 = vunpack.c.l.b16 %v383
        %v586 = vunpack.c.h.b16 %v383
        %v587 = vunpack.c.l.b16 %v384
        %v588 = vunpack.c.l.b16 %v385
        %v589 = vunpack.c.h.b16 %v385
        %v590 = vunpack.c.l.b16 %v386
        %v591 = vunpack.c.h.b16 %v386
        %v592 = vunpack.c.l.b16 %v387
        %v593 = vunpack.c.l.b16 %v388
        %v594 = vunpack.c.h.b16 %v388
        %v595 = vunpack.c.l.b16 %v389
        %v596 = vunpack.c.h.b16 %v389
        %v597 = vunpack.c.l.b16 %v390
        %v598 = vunpack.c.l.b16 %v391
        %v599 = vunpack.c.h.b16 %v391
        %v600 = vunpack.c.l.b16 %v392
        %v601 = vunpack.c.h.b16 %v392
        %v602 = vunpack.c.l.b16 %v393
        %v603 = vunpack.c.l.b16 %v394
        %v604 = vunpack.c.h.b16 %v394
        %v605 = vunpack.c.l.b16 %v395
        %v606 = vunpack.c.h.b16 %v395
        %v607 = vunpack.c.l.b16 %v396
        %v608 = vunpack.c.l.b16 %v397
        %v609 = vunpack.c.h.b16 %v397
        %v610 = vunpack.c.l.b16 %v398
        %v611 = vunpack.c.h.b16 %v398
        %v612 = vunpack.c.l.b16 %v399
        %v613 = vunpack.c.l.b16 %v400
        %v614 = vunpack.c.h.b16 %v400
        %v615 = vunpack.c.l.b16 %v401
        %v616 = vunpack.c.h.b16 %v401
        %v617 = vunpack.c.l.b16 %v402
        %v618 = vpack.c.b16 %v543, %v538
        %v619 = vpack.c.b16 %v544, %v539
        %v620 = vpack.c.b16 %v545, %v540
        %v621 = vpack.c.b16 %v546, %v541
        %v622 = vpack.c.b16 %v547, %v542
        %v623 = vpack.c.b16 %v553, %v548
        %v624 = vpack.c.b16 %v554, %v549
        %v625 = vpack.c.b16 %v555, %v550
        %v626 = vpack.c.b16 %v556, %v551
        %v627 = vpack.c.b16 %v557, %v552
        %v628 = vpack.c.b16 %v563, %v558
        %v629 = vpack.c.b16 %v564, %v559
        %v630 = vpack.c.b16 %v565, %v560
        %v631 = vpack.c.b16 %v566, %v561
        %v632 = vpack.c.b16 %v567, %v562
        %v633 = vpack.c.b16 %v573, %v568
        %v634 = vpack.c.b16 %v574, %v569
        %v635 = vpack.c.b16 %v575, %v570
        %v636 = vpack.c.b16 %v576, %v571
        %v637 = vpack.c.b16 %v577, %v572
        %v638 = vpack.c.b16 %v583, %v578
        %v639 = vpack.c.b16 %v584, %v579
        %v640 = vpack.c.b16 %v585, %v580
        %v641 = vpack.c.b16 %v586, %v581
        %v642 = vpack.c.b16 %v587, %v582
        %v643 = vpack.c.b16 %v593, %v588
        %v644 = vpack.c.b16 %v594, %v589
        %v645 = vpack.c.b16 %v595, %v590
        %v646 = vpack.c.b16 %v596, %v591
        %v647 = vpack.c.b16 %v597, %v592
        %v648 = vpack.c.b16 %v603, %v598
        %v649 = vpack.c.b16 %v604, %v599
        %v650 = vpack.c.b16 %v605, %v600
        %v651 = vpack.c.b16 %v606, %v601
        %v652 = vpack.c.b16 %v607, %v602
        %v653 = vpack.c.b16 %v613, %v608
        %v654 = vpack.c.b16 %v614, %v609
        %v655 = vpack.c.b16 %v615, %v610
        %v656 = vpack.c.b16 %v616, %v611
        %v657 = vpack.c.b16 %v617, %v612
        %v778 = vunpack.c.l.b16 %v403
        %v779 = vunpack.c.l.b16 %v404
        %v780 = vunpack.c.l.b16 %v405
        %v781 = vunpack.c.l.b16 %v406
        %v782 = vunpack.c.l.b16 %v407
        %v783 = vunpack.c.l.b16 %v408
        %v784 = vunpack.c.l.b16 %v409
        %v785 = vunpack.c.l.b16 %v410
        %v786 = vunpack.c.l.b16 %v411
        %v787 = vunpack.c.l.b16 %v412
        %v788 = vunpack.c.l.b16 %v413
        %v789 = vunpack.c.l.b16 %v414
        %v790 = vunpack.c.l.b16 %v415
        %v791 = vunpack.c.l.b16 %v416
        %v792 = vunpack.c.l.b16 %v417
        %v793 = vunpack.c.l.b16 %v418
        %v794 = vunpack.c.l.b16 %v419
        %v795 = vunpack.c.l.b16 %v420
        %v796 = vunpack.c.l.b16 %v421
        %v797 = vunpack.c.l.b16 %v422
        %v798 = vunpack.c.l.b16 %v423
        %v799 = vunpack.c.l.b16 %v424
        %v800 = vunpack.c.l.b16 %v425
        %v801 = vunpack.c.l.b16 %v426
        %v802 = vunpack.c.l.b16 %v427
        %v803 = vunpack.c.l.b16 %v428
        %v804 = vunpack.c.l.b16 %v429
        %v805 = vunpack.c.l.b16 %v430
        %v806 = vunpack.c.l.b16 %v431
        %v807 = vunpack.c.l.b16 %v432
        %v808 = vunpack.c.l.b16 %v433
        %v809 = vunpack.c.l.b16 %v434
        %v810 = vunpack.c.l.b16 %v435
        %v811 = vunpack.c.l.b16 %v436
        %v812 = vunpack.c.l.b16 %v437
        %v813 = vunpack.c.l.b16 %v438
        %v814 = vunpack.c.l.b16 %v439
        %v815 = vunpack.c.l.b16 %v440
        %v816 = vunpack.c.l.b16 %v441
        %v817 = vunpack.c.l.b16 %v442
        %v818 = vunpack.c.l.b16 %v443
        %v819 = vunpack.c.l.b16 %v444
        %v820 = vunpack.c.l.b16 %v445
        %v821 = vunpack.c.l.b16 %v446
        %v822 = vunpack.c.l.b16 %v447
        %v823 = vunpack.c.l.b16 %v448
        %v824 = vunpack.c.l.b16 %v449
        %v825 = vunpack.c.l.b16 %v450
        %v826 = vunpack.c.l.b16 %v451
        %v827 = vunpack.c.l.b16 %v452
        %v828 = vunpack.c.l.b16 %v453
        %v829 = vunpack.c.l.b16 %v454
        %v830 = vunpack.c.l.b16 %v455
        %v831 = vunpack.c.l.b16 %v456
        %v832 = vunpack.c.l.b16 %v457
        %v833 = vunpack.c.l.b16 %v458
        %v834 = vunpack.c.l.b16 %v459
        %v835 = vunpack.c.l.b16 %v460
        %v836 = vunpack.c.l.b16 %v461
        %v837 = vunpack.c.l.b16 %v462
        %v838 = vunpack.c.l.b16 %v463
        %v839 = vunpack.c.l.b16 %v464
        %v840 = vunpack.c.l.b16 %v465
        %v841 = vunpack.c.l.b16 %v466
        %v842 = vunpack.c.l.b16 %v467
        %v843 = vunpack.c.l.b16 %v468
        %v844 = vunpack.c.l.b16 %v469
        %v845 = vunpack.c.l.b16 %v470
        %v846 = vunpack.c.l.b16 %v471
        %v847 = vunpack.c.l.b16 %v472
        %v848 = vunpack.c.l.b16 %v473
        %v849 = vunpack.c.l.b16 %v474
        %v850 = vunpack.c.l.b16 %v475
        %v851 = vunpack.c.l.b16 %v476
        %v852 = vunpack.c.l.b16 %v477
        %v853 = vunpack.c.l.b16 %v478
        %v854 = vunpack.c.l.b16 %v479
        %v855 = vunpack.c.l.b16 %v480
        %v856 = vunpack.c.l.b16 %v481
        %v857 = vunpack.c.l.b16 %v482
        %v858 = vpack.c.b16 %v779, %v778
        %v859 = vpack.c.b16 %v781, %v780
        %v860 = vpack.c.b16 %v783, %v782
        %v861 = vpack.c.b16 %v785, %v784
        %v862 = vpack.c.b16 %v787, %v786
        %v863 = vpack.c.b16 %v789, %v788
        %v864 = vpack.c.b16 %v791, %v790
        %v865 = vpack.c.b16 %v793, %v792
        %v866 = vpack.c.b16 %v795, %v794
        %v867 = vpack.c.b16 %v797, %v796
        %v868 = vpack.c.b16 %v799, %v798
        %v869 = vpack.c.b16 %v801, %v800
        %v870 = vpack.c.b16 %v803, %v802
        %v871 = vpack.c.b16 %v805, %v804
        %v872 = vpack.c.b16 %v807, %v806
        %v873 = vpack.c.b16 %v809, %v808
        %v874 = vpack.c.b16 %v811, %v810
        %v875 = vpack.c.b16 %v813, %v812
        %v876 = vpack.c.b16 %v815, %v814
        %v877 = vpack.c.b16 %v817, %v816
        %v878 = vpack.c.b16 %v819, %v818
        %v879 = vpack.c.b16 %v821, %v820
        %v880 = vpack.c.b16 %v823, %v822
        %v881 = vpack.c.b16 %v825, %v824
        %v882 = vpack.c.b16 %v827, %v826
        %v883 = vpack.c.b16 %v829, %v828
        %v884 = vpack.c.b16 %v831, %v830
        %v885 = vpack.c.b16 %v833, %v832
        %v886 = vpack.c.b16 %v835, %v834
        %v887 = vpack.c.b16 %v837, %v836
        %v888 = vpack.c.b16 %v839, %v838
        %v889 = vpack.c.b16 %v841, %v840
        %v890 = vpack.c.b16 %v843, %v842
        %v891 = vpack.c.b16 %v845, %v844
        %v892 = vpack.c.b16 %v847, %v846
        %v893 = vpack.c.b16 %v849, %v848
        %v894 = vpack.c.b16 %v851, %v850
        %v895 = vpack.c.b16 %v853, %v852
        %v896 = vpack.c.b16 %v855, %v854
        %v897 = vpack.c.b16 %v857, %v856
        %938 = vmatprep.subr.bf16.mxu0 0
        %939 = vmatpush1.bf16.msra.mxu0 %v858
        %940 = vmatprep.subr.bf16.mxu0 0
        %941 = vmatpush1.bf16.msra.mxu0 %v859
        %942 = vmatprep.subr.bf16.mxu0 0
        %943 = vmatpush1.bf16.msra.mxu0 %v860
        %944 = vmatprep.subr.bf16.mxu0 0
        %945 = vmatpush1.bf16.msra.mxu0 %v861
        %946 = vmatprep.subr.bf16.mxu0 0
        %947 = vmatpush1.bf16.msra.mxu0 %v862
        %948 = vmatprep.subr.bf16.mxu0 0
        %949 = vmatpush1.bf16.msra.mxu0 %v863
        %950 = vmatprep.subr.bf16.mxu0 0
        %951 = vmatpush1.bf16.msra.mxu0 %v864
        %952 = vmatprep.subr.bf16.mxu0 0
        %953 = vmatpush1.bf16.msra.mxu0 %v865
        %954 = vmatprep.subr.bf16.mxu0 0
        %955 = vmatpush1.bf16.msra.mxu0 %v866
        %956 = vmatprep.subr.bf16.mxu0 0
        %957 = vmatpush1.bf16.msra.mxu0 %v867
        %958 = vmatprep.subr.bf16.mxu0 0
        %959 = vmatpush1.bf16.msra.mxu0 %v868
        %960 = vmatprep.subr.bf16.mxu0 0
        %961 = vmatpush1.bf16.msra.mxu0 %v869
        %962 = vmatprep.subr.bf16.mxu0 0
        %963 = vmatpush1.bf16.msra.mxu0 %v870
        %964 = vmatprep.subr.bf16.mxu0 0
        %965 = vmatpush1.bf16.msra.mxu0 %v871
        %966 = vmatprep.subr.bf16.mxu0 0
        %967 = vmatpush1.bf16.msra.mxu0 %v872
        %968 = vmatprep.subr.bf16.mxu0 0
        %969 = vmatpush1.bf16.msra.mxu0 %v873
        %970 = vmatprep.mubr.bf16.mxu0 %v619
        %971 = vmatmul.mubr.bf16.gmra.mrb[0].mxu0 %v618
        %v972 = vpop.f32.mrb[0].mxu0
        %v973 = vadd.f32 %v488, %v972
        %v974 = vpop.f32.mrb[0].mxu0
        %v975 = vpop.f32.mrb[0].mxu0
        %v976 = vadd.f32 %v488, %v975
        %v977 = vpop.f32.mrb[0].mxu0
        %978 = vmatprep.mubr.bf16.mxu0 %v624
        %979 = vmatmul.mubr.bf16.gmra.mrb[0].mxu0 %v623
        %v980 = vpop.f32.mrb[0].mxu0
        %v981 = vadd.f32 %v488, %v980
        %v982 = vpop.f32.mrb[0].mxu0
        %v983 = vpop.f32.mrb[0].mxu0
        %v984 = vadd.f32 %v488, %v983
        %v985 = vpop.f32.mrb[0].mxu0
        %986 = vmatprep.mubr.bf16.mxu0 %v629
        %987 = vmatmul.mubr.bf16.gmra.mrb[0].mxu0 %v628
        %v988 = vpop.f32.mrb[0].mxu0
        %v989 = vadd.f32 %v488, %v988
        %v990 = vpop.f32.mrb[0].mxu0
        %v991 = vpop.f32.mrb[0].mxu0
        %v992 = vadd.f32 %v488, %v991
        %v993 = vpop.f32.mrb[0].mxu0
        %994 = vmatprep.mubr.bf16.mxu0 %v634
        %995 = vmatmul.mubr.bf16.gmra.mrb[0].mxu0 %v633
        %v996 = vpop.f32.mrb[0].mxu0
        %v997 = vadd.f32 %v488, %v996
        %v998 = vpop.f32.mrb[0].mxu0
        %v999 = vpop.f32.mrb[0].mxu0
        %v1000 = vadd.f32 %v488, %v999
        %v1001 = vpop.f32.mrb[0].mxu0
        %1002 = vmatprep.mubr.bf16.mxu0 %v639
        %1003 = vmatmul.mubr.bf16.gmra.mrb[0].mxu0 %v638
        %v1004 = vpop.f32.mrb[0].mxu0
        %v1005 = vadd.f32 %v488, %v1004
        %v1006 = vpop.f32.mrb[0].mxu0
        %v1007 = vpop.f32.mrb[0].mxu0
        %v1008 = vadd.f32 %v488, %v1007
        %v1009 = vpop.f32.mrb[0].mxu0
        %1010 = vmatprep.mubr.bf16.mxu0 %v644
        %1011 = vmatmul.mubr.bf16.gmra.mrb[0].mxu0 %v643
        %v1012 = vpop.f32.mrb[0].mxu0
        %v1013 = vadd.f32 %v488, %v1012
        %v1014 = vpop.f32.mrb[0].mxu0
        %v1015 = vpop.f32.mrb[0].mxu0
        %v1016 = vadd.f32 %v488, %v1015
        %v1017 = vpop.f32.mrb[0].mxu0
        %1018 = vmatprep.mubr.bf16.mxu0 %v649
        %1019 = vmatmul.mubr.bf16.gmra.mrb[0].mxu0 %v648
        %v1020 = vpop.f32.mrb[0].mxu0
        %v1021 = vadd.f32 %v488, %v1020
        %v1022 = vpop.f32.mrb[0].mxu0
        %v1023 = vpop.f32.mrb[0].mxu0
        %v1024 = vadd.f32 %v488, %v1023
        %v1025 = vpop.f32.mrb[0].mxu0
        %1026 = vmatprep.mubr.bf16.mxu0 %v654
        %1027 = vmatmul.mubr.bf16.gmra.mrb[0].mxu0 %v653
        %v1028 = vpop.f32.mrb[0].mxu0
        %v1029 = vadd.f32 %v488, %v1028
        %v1030 = vpop.f32.mrb[0].mxu0
        %v1031 = vpop.f32.mrb[0].mxu0
        %v1032 = vadd.f32 %v488, %v1031
        %v1033 = vpop.f32.mrb[0].mxu0
        %1034 = vdwg.mxu0
        %1035 = vmatprep.subr.bf16.mxu0 0
        %1036 = vmatpush1.bf16.msra.mxu0 %v874
        %1037 = vmatprep.subr.bf16.mxu0 0
        %1038 = vmatpush1.bf16.msra.mxu0 %v875
        %1039 = vmatprep.subr.bf16.mxu0 0
        %1040 = vmatpush1.bf16.msra.mxu0 %v876
        %1041 = vmatprep.subr.bf16.mxu0 0
        %1042 = vmatpush1.bf16.msra.mxu0 %v877
        %1043 = vmatprep.subr.bf16.mxu0 0
        %1044 = vmatpush1.bf16.msra.mxu0 %v878
        %1045 = vmatprep.subr.bf16.mxu0 0
        %1046 = vmatpush1.bf16.msra.mxu0 %v879
        %1047 = vmatprep.subr.bf16.mxu0 0
        %1048 = vmatpush1.bf16.msra.mxu0 %v880
        %1049 = vmatprep.subr.bf16.mxu0 0
        %1050 = vmatpush1.bf16.msra.mxu0 %v881
        %1051 = vmatprep.subr.bf16.mxu0 0
        %1052 = vmatpush1.bf16.msra.mxu0 %v882
        %1053 = vmatprep.subr.bf16.mxu0 0
        %1054 = vmatpush1.bf16.msra.mxu0 %v883
        %1055 = vmatprep.subr.bf16.mxu0 0
        %1056 = vmatpush1.bf16.msra.mxu0 %v884
        %1057 = vmatprep.subr.bf16.mxu0 0
        %1058 = vmatpush1.bf16.msra.mxu0 %v885
        %1059 = vmatprep.subr.bf16.mxu0 0
        %1060 = vmatpush1.bf16.msra.mxu0 %v886
        %1061 = vmatprep.subr.bf16.mxu0 0
        %1062 = vmatpush1.bf16.msra.mxu0 %v887
        %1063 = vmatprep.subr.bf16.mxu0 0
        %1064 = vmatpush1.bf16.msra.mxu0 %v888
        %1065 = vmatprep.subr.bf16.mxu0 0
        %1066 = vmatpush1.bf16.msra.mxu0 %v889
        %1067 = vmatprep.mubr.bf16.mxu0 %v621
        %1068 = vmatmul.mubr.bf16.gmra.mrb[0].mxu0 %v620
        %v1069 = vpop.f32.mrb[0].mxu0
        %v1070 = vadd.f32 %v973, %v1069
        %v1071 = vpop.f32.mrb[0].mxu0
        %v1072 = vpop.f32.mrb[0].mxu0
        %v1073 = vadd.f32 %v976, %v1072
        %v1074 = vpop.f32.mrb[0].mxu0
        %1075 = vmatprep.mubr.bf16.mxu0 %v626
        %1076 = vmatmul.mubr.bf16.gmra.mrb[0].mxu0 %v625
        %v1077 = vpop.f32.mrb[0].mxu0
        %v1078 = vadd.f32 %v981, %v1077
        %v1079 = vpop.f32.mrb[0].mxu0
        %v1080 = vpop.f32.mrb[0].mxu0
        %v1081 = vadd.f32 %v984, %v1080
        %v1082 = vpop.f32.mrb[0].mxu0
        %1083 = vmatprep.mubr.bf16.mxu0 %v631
        %1084 = vmatmul.mubr.bf16.gmra.mrb[0].mxu0 %v630
        %v1085 = vpop.f32.mrb[0].mxu0
        %v1086 = vadd.f32 %v989, %v1085
        %v1087 = vpop.f32.mrb[0].mxu0
        %v1088 = vpop.f32.mrb[0].mxu0
        %v1089 = vadd.f32 %v992, %v1088
        %v1090 = vpop.f32.mrb[0].mxu0
        %1091 = vmatprep.mubr.bf16.mxu0 %v636
        %1092 = vmatmul.mubr.bf16.gmra.mrb[0].mxu0 %v635
        %v1093 = vpop.f32.mrb[0].mxu0
        %v1094 = vadd.f32 %v997, %v1093
        %v1095 = vpop.f32.mrb[0].mxu0
        %v1096 = vpop.f32.mrb[0].mxu0
        %v1097 = vadd.f32 %v1000, %v1096
        %v1098 = vpop.f32.mrb[0].mxu0
        %1099 = vmatprep.mubr.bf16.mxu0 %v641
        %1100 = vmatmul.mubr.bf16.gmra.mrb[0].mxu0 %v640
        %v1101 = vpop.f32.mrb[0].mxu0
        %v1102 = vadd.f32 %v1005, %v1101
        %v1103 = vpop.f32.mrb[0].mxu0
        %v1104 = vpop.f32.mrb[0].mxu0
        %v1105 = vadd.f32 %v1008, %v1104
        %v1106 = vpop.f32.mrb[0].mxu0
        %1107 = vmatprep.mubr.bf16.mxu0 %v646
        %1108 = vmatmul.mubr.bf16.gmra.mrb[0].mxu0 %v645
        %v1109 = vpop.f32.mrb[0].mxu0
        %v1110 = vadd.f32 %v1013, %v1109
        %v1111 = vpop.f32.mrb[0].mxu0
        %v1112 = vpop.f32.mrb[0].mxu0
        %v1113 = vadd.f32 %v1016, %v1112
        %v1114 = vpop.f32.mrb[0].mxu0
        %1115 = vmatprep.mubr.bf16.mxu0 %v651
        %1116 = vmatmul.mubr.bf16.gmra.mrb[0].mxu0 %v650
        %v1117 = vpop.f32.mrb[0].mxu0
        %v1118 = vadd.f32 %v1021, %v1117
        %v1119 = vpop.f32.mrb[0].mxu0
        %v1120 = vpop.f32.mrb[0].mxu0
        %v1121 = vadd.f32 %v1024, %v1120
        %v1122 = vpop.f32.mrb[0].mxu0
        %1123 = vmatprep.mubr.bf16.mxu0 %v656
        %1124 = vmatmul.mubr.bf16.gmra.mrb[0].mxu0 %v655
        %v1125 = vpop.f32.mrb[0].mxu0
        %v1126 = vadd.f32 %v1029, %v1125
        %v1127 = vpop.f32.mrb[0].mxu0
        %v1128 = vpop.f32.mrb[0].mxu0
        %v1129 = vadd.f32 %v1032, %v1128
        %v1130 = vpop.f32.mrb[0].mxu0
        %1131 = vdwg.mxu0
        %1132 = vmatprep.subr.bf16.mxu0 0
        %1133 = vmatpush1.bf16.msra.mxu0 %v890
        %1134 = vmatprep.subr.bf16.mxu0 0
        %1135 = vmatpush1.bf16.msra.mxu0 %v891
        %1136 = vmatprep.subr.bf16.mxu0 0
        %1137 = vmatpush1.bf16.msra.mxu0 %v892
        %1138 = vmatprep.subr.bf16.mxu0 0
        %1139 = vmatpush1.bf16.msra.mxu0 %v893
        %1140 = vmatprep.subr.bf16.mxu0 0
        %1141 = vmatpush1.bf16.msra.mxu0 %v894
        %1142 = vmatprep.subr.bf16.mxu0 0
        %1143 = vmatpush1.bf16.msra.mxu0 %v895
        %1144 = vmatprep.subr.bf16.mxu0 0
        %1145 = vmatpush1.bf16.msra.mxu0 %v896
        %1146 = vmatprep.subr.bf16.mxu0 0
        %1147 = vmatpush1.bf16.msra.mxu0 %v897
        %1148 = vmatprep.subr.bf16.mxu0 0
        %1149 = vmatpush1.bf16.msra.mxu0 0
        %1150 = vmatprep.subr.bf16.mxu0 0
        %1151 = vmatpush1.bf16.msra.mxu0 0
        %1152 = vmatprep.subr.bf16.mxu0 0
        %1153 = vmatpush1.bf16.msra.mxu0 0
        %1154 = vmatprep.subr.bf16.mxu0 0
        %1155 = vmatpush1.bf16.msra.mxu0 0
        %1156 = vmatprep.subr.bf16.mxu0 0
        %1157 = vmatpush1.bf16.msra.mxu0 0
        %1158 = vmatprep.subr.bf16.mxu0 0
        %1159 = vmatpush1.bf16.msra.mxu0 0
        %1160 = vmatprep.subr.bf16.mxu0 0
        %1161 = vmatpush1.bf16.msra.mxu0 0
        %1162 = vmatprep.subr.bf16.mxu0 0
        %1163 = vmatpush1.bf16.msra.mxu0 0
        %1164 = vmatprep.mubr.bf16.mxu0 0
        %1165 = vmatmul.mubr.bf16.gmra.mrb[0].mxu0 %v622
        %v1166 = vpop.f32.mrb[0].mxu0
        %v1167 = vadd.f32 %v1070, %v1166
        %v1168 = vpop.f32.mrb[0].mxu0
        %v1169 = vpop.f32.mrb[0].mxu0
        %v1170 = vadd.f32 %v1073, %v1169
        %v1171 = vpop.f32.mrb[0].mxu0
        %1172 = vmatprep.mubr.bf16.mxu0 0
        %1173 = vmatmul.mubr.bf16.gmra.mrb[0].mxu0 %v627
        %v1174 = vpop.f32.mrb[0].mxu0
        %v1175 = vadd.f32 %v1078, %v1174
        %v1176 = vpop.f32.mrb[0].mxu0
        %v1177 = vpop.f32.mrb[0].mxu0
        %v1178 = vadd.f32 %v1081, %v1177
        %v1179 = vpop.f32.mrb[0].mxu0
        %1180 = vmatprep.mubr.bf16.mxu0 0
        %1181 = vmatmul.mubr.bf16.gmra.mrb[0].mxu0 %v632
        %v1182 = vpop.f32.mrb[0].mxu0
        %v1183 = vadd.f32 %v1086, %v1182
        %v1184 = vpop.f32.mrb[0].mxu0
        %v1185 = vpop.f32.mrb[0].mxu0
        %v1186 = vadd.f32 %v1089, %v1185
        %v1187 = vpop.f32.mrb[0].mxu0
        %1188 = vmatprep.mubr.bf16.mxu0 0
        %1189 = vmatmul.mubr.bf16.gmra.mrb[0].mxu0 %v637
        %v1190 = vpop.f32.mrb[0].mxu0
        %v1191 = vadd.f32 %v1094, %v1190
        %v1192 = vpop.f32.mrb[0].mxu0
        %v1193 = vpop.f32.mrb[0].mxu0
        %v1194 = vadd.f32 %v1097, %v1193
        %v1195 = vpop.f32.mrb[0].mxu0
        %1196 = vmatprep.mubr.bf16.mxu0 0
        %1197 = vmatmul.mubr.bf16.gmra.mrb[0].mxu0 %v642
        %v1198 = vpop.f32.mrb[0].mxu0
        %v1199 = vadd.f32 %v1102, %v1198
        %v1200 = vpop.f32.mrb[0].mxu0
        %v1201 = vpop.f32.mrb[0].mxu0
        %v1202 = vadd.f32 %v1105, %v1201
        %v1203 = vpop.f32.mrb[0].mxu0
        %1204 = vmatprep.mubr.bf16.mxu0 0
        %1205 = vmatmul.mubr.bf16.gmra.mrb[0].mxu0 %v647
        %v1206 = vpop.f32.mrb[0].mxu0
        %v1207 = vadd.f32 %v1110, %v1206
        %v1208 = vpop.f32.mrb[0].mxu0
        %v1209 = vpop.f32.mrb[0].mxu0
        %v1210 = vadd.f32 %v1113, %v1209
        %v1211 = vpop.f32.mrb[0].mxu0
        %1212 = vmatprep.mubr.bf16.mxu0 0
        %1213 = vmatmul.mubr.bf16.gmra.mrb[0].mxu0 %v652
        %v1214 = vpop.f32.mrb[0].mxu0
        %v1215 = vadd.f32 %v1118, %v1214
        %v1216 = vpop.f32.mrb[0].mxu0
        %v1217 = vpop.f32.mrb[0].mxu0
        %v1218 = vadd.f32 %v1121, %v1217
        %v1219 = vpop.f32.mrb[0].mxu0
        %1220 = vmatprep.mubr.bf16.mxu0 0
        %1221 = vmatmul.mubr.bf16.gmra.mrb[0].mxu0 %v657
        %v1222 = vpop.f32.mrb[0].mxu0
        %v1223 = vadd.f32 %v1126, %v1222
        %v1224 = vpop.f32.mrb[0].mxu0
        %v1225 = vpop.f32.mrb[0].mxu0
        %v1226 = vadd.f32 %v1129, %v1225
        %v1227 = vpop.f32.mrb[0].mxu0
        %1228 = vdwg.mxu0
        %v1229 = vld [vmem:[%s344] sm:$0xf]
        %v1230 = vld [vmem:[%s344 + $0x4] sm:$0xf]
        %v1231 = vld [vmem:[%s344 + $0x8] sm:$0xf]
        %v1232 = vld [vmem:[%s344 + $0xc] sm:$0xf]
        %v1233 = vld [vmem:[%s344 + $0x10] sm:$0xf]
        %v1234 = vld [vmem:[%s344 + $0x14] sm:$0xf]
        %v1235 = vld [vmem:[%s344 + $0x18] sm:$0xf]
        %v1236 = vld [vmem:[%s344 + $0x1c] sm:$0xf]
        %v1237 = vld [vmem:[%s344 + $0x20] sm:$0xf]
        %v1238 = vld [vmem:[%s344 + $0x24] sm:$0xf]
        %v1239 = vld [vmem:[%s344 + $0x28] sm:$0xf]
        %v1240 = vld [vmem:[%s344 + $0x2c] sm:$0xf]
        %v1241 = vld [vmem:[%s344 + $0x30] sm:$0xf]
        %v1242 = vld [vmem:[%s344 + $0x34] sm:$0xf]
        %v1243 = vld [vmem:[%s344 + $0x38] sm:$0xf]
        %v1244 = vld [vmem:[%s344 + $0x3c] sm:$0xf]
        %v1245 = vld [vmem:[%s349] sm:$0xf]
        %v1246 = vld [vmem:[%s349 + $0x4] sm:$0xf]
        %v1247 = vld [vmem:[%s349 + $0x8] sm:$0xf]
        %v1248 = vld [vmem:[%s349 + $0xc] sm:$0xf]
        %v1249 = vld [vmem:[%s349 + $0x10] sm:$0xf]
        %v1250 = vld [vmem:[%s349 + $0x14] sm:$0xf]
        %v1251 = vld [vmem:[%s349 + $0x18] sm:$0xf]
        %v1252 = vld [vmem:[%s349 + $0x1c] sm:$0xf]
        %v1253 = vld [vmem:[%s349 + $0x20] sm:$0xf]
        %v1254 = vld [vmem:[%s349 + $0x24] sm:$0xf]
        %v1255 = vld [vmem:[%s349 + $0x28] sm:$0xf]
        %v1256 = vld [vmem:[%s349 + $0x2c] sm:$0xf]
        %v1257 = vld [vmem:[%s349 + $0x30] sm:$0xf]
        %v1258 = vld [vmem:[%s349 + $0x34] sm:$0xf]
        %v1259 = vld [vmem:[%s349 + $0x38] sm:$0xf]
        %v1260 = vld [vmem:[%s349 + $0x3c] sm:$0xf]
        %v1261 = vld [vmem:[%s352] sm:$0x1]
        %v1263 = vlaneseq
        %v1264 = vshrl.u32 %v1263, 7
        %v1265 = vsub.s32 0, %v1264
        %v1266 = vrot.slane %v1261, %v1265
        %v1284 = vunpack.c.l.b16 %v1229
        %v1285 = vunpack.c.l.b16 %v1230
        %v1286 = vunpack.c.l.b16 %v1231
        %v1287 = vunpack.c.l.b16 %v1232
        %v1288 = vunpack.c.l.b16 %v1233
        %v1289 = vunpack.c.l.b16 %v1234
        %v1290 = vunpack.c.l.b16 %v1235
        %v1291 = vunpack.c.l.b16 %v1236
        %v1292 = vunpack.c.l.b16 %v1237
        %v1293 = vunpack.c.l.b16 %v1238
        %v1294 = vunpack.c.l.b16 %v1239
        %v1295 = vunpack.c.l.b16 %v1240
        %v1296 = vunpack.c.l.b16 %v1241
        %v1297 = vunpack.c.l.b16 %v1242
        %v1298 = vunpack.c.l.b16 %v1243
        %v1299 = vunpack.c.l.b16 %v1244
        %v1300 = vpack.c.b16 %v1285, %v1284
        %v1301 = vpack.c.b16 %v1287, %v1286
        %v1302 = vpack.c.b16 %v1289, %v1288
        %v1303 = vpack.c.b16 %v1291, %v1290
        %v1304 = vpack.c.b16 %v1293, %v1292
        %v1305 = vpack.c.b16 %v1295, %v1294
        %v1306 = vpack.c.b16 %v1297, %v1296
        %v1307 = vpack.c.b16 %v1299, %v1298
        %v1332 = vunpack.c.l.b16 %v1245
        %v1333 = vunpack.c.l.b16 %v1246
        %v1334 = vunpack.c.l.b16 %v1247
        %v1335 = vunpack.c.l.b16 %v1248
        %v1336 = vunpack.c.l.b16 %v1249
        %v1337 = vunpack.c.l.b16 %v1250
        %v1338 = vunpack.c.l.b16 %v1251
        %v1339 = vunpack.c.l.b16 %v1252
        %v1340 = vunpack.c.l.b16 %v1253
        %v1341 = vunpack.c.l.b16 %v1254
        %v1342 = vunpack.c.l.b16 %v1255
        %v1343 = vunpack.c.l.b16 %v1256
        %v1344 = vunpack.c.l.b16 %v1257
        %v1345 = vunpack.c.l.b16 %v1258
        %v1346 = vunpack.c.l.b16 %v1259
        %v1347 = vunpack.c.l.b16 %v1260
        %v1348 = vpack.c.b16 %v1333, %v1332
        %v1349 = vpack.c.b16 %v1335, %v1334
        %v1350 = vpack.c.b16 %v1337, %v1336
        %v1351 = vpack.c.b16 %v1339, %v1338
        %v1352 = vpack.c.b16 %v1341, %v1340
        %v1353 = vpack.c.b16 %v1343, %v1342
        %v1354 = vpack.c.b16 %v1345, %v1344
        %v1355 = vpack.c.b16 %v1347, %v1346
        %1364 = vmatprep.subr.bf16.mxu0 0
        %1365 = vmatpush1.bf16.msra.mxu0 %v1348
        %1366 = vmatprep.subr.bf16.mxu0 0
        %1367 = vmatpush1.bf16.msra.mxu0 %v1349
        %1368 = vmatprep.subr.bf16.mxu0 0
        %1369 = vmatpush1.bf16.msra.mxu0 %v1350
        %1370 = vmatprep.subr.bf16.mxu0 0
        %1371 = vmatpush1.bf16.msra.mxu0 %v1351
        %1372 = vmatprep.subr.bf16.mxu0 0
        %1373 = vmatpush1.bf16.msra.mxu0 %v1352
        %1374 = vmatprep.subr.bf16.mxu0 0
        %1375 = vmatpush1.bf16.msra.mxu0 %v1353
        %1376 = vmatprep.subr.bf16.mxu0 0
        %1377 = vmatpush1.bf16.msra.mxu0 %v1354
        %1378 = vmatprep.subr.bf16.mxu0 0
        %1379 = vmatpush1.bf16.msra.mxu0 %v1355
        %1380 = vmatprep.subr.bf16.mxu0 0
        %1381 = vmatpush1.bf16.msra.mxu0 0
        %1382 = vmatprep.subr.bf16.mxu0 0
        %1383 = vmatpush1.bf16.msra.mxu0 0
        %1384 = vmatprep.subr.bf16.mxu0 0
        %1385 = vmatpush1.bf16.msra.mxu0 0
        %1386 = vmatprep.subr.bf16.mxu0 0
        %1387 = vmatpush1.bf16.msra.mxu0 0
        %1388 = vmatprep.subr.bf16.mxu0 0
        %1389 = vmatpush1.bf16.msra.mxu0 0
        %1390 = vmatprep.subr.bf16.mxu0 0
        %1391 = vmatpush1.bf16.msra.mxu0 0
        %1392 = vmatprep.subr.bf16.mxu0 0
        %1393 = vmatpush1.bf16.msra.mxu0 0
        %1394 = vmatprep.subr.bf16.mxu0 0
        %1395 = vmatpush1.bf16.msra.mxu0 0
        %1396 = vmatprep.mubr.bf16.mxu0 0
        %1397 = vmatmul.mubr.bf16.gmra.mrb[0].mxu0 %v1300
        %v1398 = vpop.f32.mrb[0].mxu0
        %v1399 = vadd.f32 %v1266, %v1398
        %v1400 = vpop.f32.mrb[0].mxu0
        %v1401 = vpop.f32.mrb[0].mxu0
        %v1402 = vadd.f32 %v1266, %v1401
        %v1403 = vpop.f32.mrb[0].mxu0
        %1404 = vmatprep.mubr.bf16.mxu0 0
        %1405 = vmatmul.mubr.bf16.gmra.mrb[0].mxu0 %v1301
        %v1406 = vpop.f32.mrb[0].mxu0
        %v1407 = vadd.f32 %v1266, %v1406
        %v1408 = vpop.f32.mrb[0].mxu0
        %v1409 = vpop.f32.mrb[0].mxu0
        %v1410 = vadd.f32 %v1266, %v1409
        %v1411 = vpop.f32.mrb[0].mxu0
        %1412 = vmatprep.mubr.bf16.mxu0 0
        %1413 = vmatmul.mubr.bf16.gmra.mrb[0].mxu0 %v1302
        %v1414 = vpop.f32.mrb[0].mxu0
        %v1415 = vadd.f32 %v1266, %v1414
        %v1416 = vpop.f32.mrb[0].mxu0
        %v1417 = vpop.f32.mrb[0].mxu0
        %v1418 = vadd.f32 %v1266, %v1417
        %v1419 = vpop.f32.mrb[0].mxu0
        %1420 = vmatprep.mubr.bf16.mxu0 0
        %1421 = vmatmul.mubr.bf16.gmra.mrb[0].mxu0 %v1303
        %v1422 = vpop.f32.mrb[0].mxu0
        %v1423 = vadd.f32 %v1266, %v1422
        %v1424 = vpop.f32.mrb[0].mxu0
        %v1425 = vpop.f32.mrb[0].mxu0
        %v1426 = vadd.f32 %v1266, %v1425
        %v1427 = vpop.f32.mrb[0].mxu0
        %1428 = vmatprep.mubr.bf16.mxu0 0
        %1429 = vmatmul.mubr.bf16.gmra.mrb[0].mxu0 %v1304
        %v1430 = vpop.f32.mrb[0].mxu0
        %v1431 = vadd.f32 %v1266, %v1430
        %v1432 = vpop.f32.mrb[0].mxu0
        %v1433 = vpop.f32.mrb[0].mxu0
        %v1434 = vadd.f32 %v1266, %v1433
        %v1435 = vpop.f32.mrb[0].mxu0
        %1436 = vmatprep.mubr.bf16.mxu0 0
        %1437 = vmatmul.mubr.bf16.gmra.mrb[0].mxu0 %v1305
        %v1438 = vpop.f32.mrb[0].mxu0
        %v1439 = vadd.f32 %v1266, %v1438
        %v1440 = vpop.f32.mrb[0].mxu0
        %v1441 = vpop.f32.mrb[0].mxu0
        %v1442 = vadd.f32 %v1266, %v1441
        %v1443 = vpop.f32.mrb[0].mxu0
        %1444 = vmatprep.mubr.bf16.mxu0 0
        %1445 = vmatmul.mubr.bf16.gmra.mrb[0].mxu0 %v1306
        %v1446 = vpop.f32.mrb[0].mxu0
        %v1447 = vadd.f32 %v1266, %v1446
        %v1448 = vpop.f32.mrb[0].mxu0
        %v1449 = vpop.f32.mrb[0].mxu0
        %v1450 = vadd.f32 %v1266, %v1449
        %v1451 = vpop.f32.mrb[0].mxu0
        %1452 = vmatprep.mubr.bf16.mxu0 0
        %1453 = vmatmul.mubr.bf16.gmra.mrb[0].mxu0 %v1307
        %v1454 = vpop.f32.mrb[0].mxu0
        %v1455 = vadd.f32 %v1266, %v1454
        %v1456 = vpop.f32.mrb[0].mxu0
        %v1457 = vpop.f32.mrb[0].mxu0
        %v1458 = vadd.f32 %v1266, %v1457
        %v1459 = vpop.f32.mrb[0].mxu0
        %1460 = vdwg.mxu0
        %v1461 = vadd.f32 %v1167, %v1399
        %v1462 = vadd.f32 %v1170, %v1402
        %v1463 = vadd.f32 %v1175, %v1407
        %v1464 = vadd.f32 %v1178, %v1410
        %v1465 = vadd.f32 %v1183, %v1415
        %v1466 = vadd.f32 %v1186, %v1418
        %v1467 = vadd.f32 %v1191, %v1423
        %v1468 = vadd.f32 %v1194, %v1426
        %v1469 = vadd.f32 %v1199, %v1431
        %v1470 = vadd.f32 %v1202, %v1434
        %v1471 = vadd.f32 %v1207, %v1439
        %v1472 = vadd.f32 %v1210, %v1442
        %v1473 = vadd.f32 %v1215, %v1447
        %v1474 = vadd.f32 %v1218, %v1450
        %v1475 = vadd.f32 %v1223, %v1455
        %v1476 = vadd.f32 %v1226, %v1458
        %v1477 = vmax.f32 %v1461, 0.0
        %v1478 = vmax.f32 %v1462, 0.0
        %v1479 = vmax.f32 %v1463, 0.0
        %v1480 = vmax.f32 %v1464, 0.0
        %v1481 = vmax.f32 %v1465, 0.0
        %v1482 = vmax.f32 %v1466, 0.0
        %v1483 = vmax.f32 %v1467, 0.0
        %v1484 = vmax.f32 %v1468, 0.0
        %v1485 = vmax.f32 %v1469, 0.0
        %v1486 = vmax.f32 %v1470, 0.0
        %v1487 = vmax.f32 %v1471, 0.0
        %v1488 = vmax.f32 %v1472, 0.0
        %v1489 = vmax.f32 %v1473, 0.0
        %v1490 = vmax.f32 %v1474, 0.0
        %v1491 = vmax.f32 %v1475, 0.0
        %v1492 = vmax.f32 %v1476, 0.0
        %1493 = vst [vmem:[%s325] sm:$0xff] %v1477
        %1494 = vst [vmem:[%s325 + $0x8] sm:$0xff] %v1478
        %1495 = vst [vmem:[%s325 + $0x10] sm:$0xff] %v1479
        %1496 = vst [vmem:[%s325 + $0x18] sm:$0xff] %v1480
        %1497 = vst [vmem:[%s325 + $0x20] sm:$0xff] %v1481
        %1498 = vst [vmem:[%s325 + $0x28] sm:$0xff] %v1482
        %1499 = vst [vmem:[%s325 + $0x30] sm:$0xff] %v1483
        %1500 = vst [vmem:[%s325 + $0x38] sm:$0xff] %v1484
        %1501 = vst [vmem:[%s325 + $0x40] sm:$0xff] %v1485
        %1502 = vst [vmem:[%s325 + $0x48] sm:$0xff] %v1486
        %1503 = vst [vmem:[%s325 + $0x50] sm:$0xff] %v1487
        %1504 = vst [vmem:[%s325 + $0x58] sm:$0xff] %v1488
        %1505 = vst [vmem:[%s325 + $0x60] sm:$0xff] %v1489
        %1506 = vst [vmem:[%s325 + $0x68] sm:$0xff] %v1490
        %1507 = vst [vmem:[%s325 + $0x70] sm:$0xff] %v1491
        %1508 = vst [vmem:[%s325 + $0x78] sm:$0xff] %v1492
        %s1509 = sand.u32 %s198, 1
        %s1510 = scalar_lea.sflag [#allocation3], %s1509
        %s1511 = sand.u32 %s198, 1
        %s1512 = smul.addr %s1511, 128
        %s1513 = scalar_lea.vmem [#allocation2], %s1512
        // Predicated region
        $region45: #{basic_block_forward.3} parent=43 // pred_check
          %p1514 = pneg %p208
        $region46: #{basic_block_forward.3} parent=43 // pred_check_branch
          %1516 = sbr.rel (%p1514) target = $region48
        $region47: #{basic_block_forward.3} parent=43 // pred_region
          %s1517 = smul.u32 16, %s24
          %s1519 = ssub.s32 2048, 2048
          %1520 = vsyncadd %s1510, %s1519
          %s1521 = sadd.s32 %s25, %s1517
          %s1522 = smul.addr %s1521, 128
          %s1523 = scalar_lea.hbm %s6, %s1522
          %s1524 = sshll.u32 %s1513, 4
          %s1525 = int_to_ptr.vmem [resolvable:$true] %s1524
          %1530 = dma.vmem_to_hbm [thread:$0]  %s1525, 2048, %s1523, %s1510, 128, 128, 8
        $region48: #{basic_block_forward.3} parent=43 // pred_fallthru
          _
      $region44: #{basic_block_forward.3} parent=5 // pred_fallthru
        _
      %p1531 = scmp.le.s32.totalorder 2, %s15
      // Predicated region
      $region49: #{basic_block_forward.3} parent=5 // pred_check
        %p1532 = pneg %p1531
      $region50: #{basic_block_forward.3} parent=5 // pred_check_branch
        %1534 = sbr.rel (%p1532) target = $region52
      $region51: #{basic_block_forward.3} parent=5 // pred_region
        %s1535 = ssub.s32 %s15, 2
        // Predicated region
        $region53: #{basic_block_forward.3} parent=51 // pred_check
          %p1536 = pneg %p214
        $region54: #{basic_block_forward.3} parent=51 // pred_check_branch
          %1538 = sbr.rel (%p1536) target = $region56
        $region55: #{basic_block_forward.3} parent=51 // pred_region
          %s1539 = sand.u32 %s199, 1
          %s1540 = scalar_lea.sflag [#allocation3], %s1539
          %s1541 = sand.u32 %s199, 1
          %s1542 = smul.addr %s1541, 128
          %s1543 = scalar_lea.vmem [#allocation2], %s1542
          %1544 = dma.done %s1540, 2048
        $region56: #{basic_block_forward.3} parent=51 // pred_fallthru
          _
      $region52: #{basic_block_forward.3} parent=5 // pred_fallthru
        _
    $region6: #{basic_block_forward.3} parent=1 // loop_footer
      %s19 = sadd.s32 1, %s15
    $region7: #{basic_block_forward.3} parent=1 // loop_footer_branch
      %14 = sbr.rel target = $region3
    $region8: #{basic_block_forward.3} parent=1 // loop_exit
      _
    %1545 = vsyncpa [#allocation3], 1
    %s1546 = scalar_lea.sflag [#allocation3], 1
    %1547 = vsyncpa %s1546, 1

</llo_original>
